<compile_context>
chip_gen: v5e
topology: v5e:2x2
jax: 0.10.0
libtpu: 0.0.40
codegen_flags: <defaults>
</compile_context>

<pallas_src>
import jax
import jax.numpy as jnp
import numpy as np
from jax.experimental import pallas as pl
from jax.experimental.pallas import tpu as pltpu

# ----------------------------- configuration --------------------------------
B = 2                      # batch
N = 16                     # "x" tokens (4x4 patch grid)
M = 16                     # "y" (memory) tokens (4x4 patch grid)
DIM = 64                   # embedding dim
HEADS = 2                  # attention heads
HD = DIM // HEADS          # head dim = 32
MLP_HID = int(DIM * 4.0)   # mlp hidden dim = 256
EPS = 1e-6                 # CroCo uses partial(nn.LayerNorm, eps=1e-6)
ROPE_BASE = 100.0          # CroCo RoPE2D(freq=100)
RQ = B * N                 # folded query rows
RK = B * M                 # folded key/value rows
NEG_INF = -1e30            # additive batch-mask value (exp underflows to 0)

# row offsets inside the packed rope/mask table
_COSX, _SINX = 0, RQ
_COSY, _SINY = 2 * RQ, 2 * RQ + RK
_MASK = 2 * RQ + 2 * RK


# ------------------------------ math helpers --------------------------------
def _layernorm(t, g, b):
    mu = jnp.mean(t, axis=-1, keepdims=True)
    var = jnp.mean(jnp.square(t - mu), axis=-1, keepdims=True)
    return (t - mu) * jax.lax.rsqrt(var + EPS) * g + b


def _erf(x):
    # Float32-accurate erf (rational erfc approximation, |err| < 1.2e-7) built
    # from exp/mul/add/select only, guaranteed to lower in Mosaic.
    a = jnp.abs(x)
    t = 1.0 / (1.0 + 0.5 * a)
    poly = -1.26551223 + t * (1.00002368 + t * (0.37409196 + t * (0.09678418 +
           t * (-0.18628806 + t * (0.27886807 + t * (-1.13520398 + t * (1.48851587 +
           t * (-0.82215223 + t * 0.17087277))))))))
    erfc = t * jnp.exp(-a * a + poly)
    return jnp.where(x >= 0.0, 1.0 - erfc, erfc - 1.0)


def _gelu(x):
    # exact (erf-based) GELU, matching torch.nn.GELU() default
    return 0.5 * x * (1.0 + _erf(x * 0.7071067811865476))


def _mm(a, w):
    # bf16 MXU operands, f32 accumulation
    return jnp.dot(a.astype(jnp.bfloat16), w.astype(jnp.bfloat16),
                   preferred_element_type=jnp.float32)


def _mm_t(a, b):
    # a @ b.T without an explicit transpose (bf16 operands, f32 accumulation)
    return jax.lax.dot_general(a.astype(jnp.bfloat16), b.astype(jnp.bfloat16),
                               (((1,), (1,)), ((), ())),
                               preferred_element_type=jnp.float32)


def _attention(q, k, v, mask, w_o, b_o, recip):
    # Batch-masked multi-head attention on batch-folded rows.  Per head:
    # one (RQ,RK) score matmul + additive batch mask, softmax, one p@v matmul,
    # and accumulation through the matching row-slice of the output projection
    # (equivalent to concat(heads) @ w_o but without the lane-offset concat).
    # The HD**-0.5 scale is already folded into the q-projection weights.
    out = None
    for h in range(HEADS):
        sl = slice(h * HD, (h + 1) * HD)
        s = _mm_t(q[:, sl], k[:, sl]) + mask
        s = s - jnp.max(s, axis=-1, keepdims=True)
        e = jnp.exp(s)
        p = e * recip(jnp.sum(e, axis=-1, keepdims=True))
        oh = _mm(p, v[:, sl])                  # (RQ, HD)
        proj = _mm(oh, w_o[sl])                # (RQ, DIM), sublane row-slice of w_o
        out = proj if out is None else out + proj
    return out + b_o


def _forward_math(xy, rope_mask, vecs, b_fc1, w_qkv, w_cq, w_ckv, w_fc1, w_sq, recip):
    # Shared by the Pallas kernel and the strict JAX reference (identical math).
    x = xy[0:RQ]
    y = xy[RQ:RQ + RK]
    cosx, sinx = rope_mask[_COSX:_COSX + RQ], rope_mask[_SINX:_SINX + RQ]
    cosy, siny = rope_mask[_COSY:_COSY + RK], rope_mask[_SINY:_SINY + RK]
    mask = rope_mask[_MASK:_MASK + RQ, 0:RK]               # (RQ, RK) additive bias

    w_ao = w_sq[0 * DIM:1 * DIM]
    w_co = w_sq[1 * DIM:2 * DIM]
    w_fc2 = w_sq[2 * DIM:2 * DIM + MLP_HID]

    g1, b1 = vecs[0:1], vecs[1:2]
    gy, by = vecs[2:3], vecs[3:4]
    g2, b2 = vecs[4:5], vecs[5:6]
    g3, b3 = vecs[6:7], vecs[7:8]
    b_ao, b_co, b_fc2 = vecs[8:9], vecs[9:10], vecs[10:11]

    # ---- x = x + attn(norm1(x), xpos) ----
    h = _layernorm(x, g1, b1)
    qkv = _mm(h, w_qkv)                                    # (RQ, 5*DIM): q,k,v,q@rot,k@rot
    q = qkv[:, 0:DIM] * cosx + qkv[:, 3 * DIM:4 * DIM] * sinx     # RoPE = pure FMA
    k = qkv[:, DIM:2 * DIM] * cosx + qkv[:, 4 * DIM:5 * DIM] * sinx
    v = qkv[:, 2 * DIM:3 * DIM]
    x = x + _attention(q, k, v, mask, w_ao, b_ao, recip)

    # ---- x = x + cross_attn(norm2(x), norm_y(y), norm_y(y), xpos, ypos) ----
    y_n = _layernorm(y, gy, by)
    h2 = _layernorm(x, g2, b2)
    qc2 = _mm(h2, w_cq)                                    # (RQ, 2*DIM): q, q@rot
    qc = qc2[:, 0:DIM] * cosx + qc2[:, DIM:2 * DIM] * sinx
    kv = _mm(y_n, w_ckv)                                   # (RK, 3*DIM): k, v, k@rot
    kc = kv[:, 0:DIM] * cosy + kv[:, 2 * DIM:3 * DIM] * siny
    vc = kv[:, DIM:2 * DIM]
    x = x + _attention(qc, kc, vc, mask, w_co, b_co, recip)

    # ---- x = x + mlp(norm3(x)) ----
    h3 = _layernorm(x, g3, b3)
    hh = _gelu(_mm(h3, w_fc1) + b_fc1)
    x = x + _mm(hh, w_fc2) + b_fc2
    return x


# ------------------------------ Pallas kernel --------------------------------
def decoder_block_kernel(xy_ref, ropem_ref, vecs_ref, bfc1_ref,
                         wqkv_ref, wcq_ref, wckv_ref, wfc1_ref, wsq_ref, out_ref):
    out_ref[...] = _forward_math(
        xy_ref[...], ropem_ref[...], vecs_ref[...], bfc1_ref[...],
        wqkv_ref[...], wcq_ref[...], wckv_ref[...], wfc1_ref[...], wsq_ref[...],
        recip=lambda t: pl.reciprocal(t, approx=True))


def decoder_block_pallas(packed_inputs):
    # Single-shot kernel: no grid, whole (tiny, ~150 KB) problem resident in
    # VMEM at once — no pipeline prologue/epilogue, no double buffering.
    vmem = pltpu.MemorySpace.VMEM
    return pl.pallas_call(
        decoder_block_kernel,
        out_shape=jax.ShapeDtypeStruct((RQ, DIM), jnp.float32),
        in_specs=[pl.BlockSpec(memory_space=vmem) for _ in packed_inputs],
        out_specs=pl.BlockSpec(memory_space=vmem),
    )(*packed_inputs)


# ----------------------------- glue / parameters -----------------------------
def rope2d_cos_sin(pos, head_dim, base=ROPE_BASE):
    # pos: (B, T, 2) int (y, x) coords.  Returns cos/sin of shape (B, T, head_dim):
    # first half from the y coordinate, second half from the x coordinate, each
    # half laid out as cat(freqs, freqs), exactly like CroCo RoPE2D.get_cos_sin.
    d = head_dim // 2
    inv_freq = 1.0 / (base ** (jnp.arange(0, d, 2, dtype=jnp.float32) / d))

    def one(p):
        f = p.astype(jnp.float32)[..., None] * inv_freq          # (B, T, d//2)
        f = jnp.concatenate([f, f], axis=-1)                      # (B, T, d)
        return jnp.cos(f), jnp.sin(f)

    cy, sy = one(pos[..., 0])
    cxx, sxx = one(pos[..., 1])
    return (jnp.concatenate([cy, cxx], axis=-1),
            jnp.concatenate([sy, sxx], axis=-1))


def rope_rot_matrix_full(dim, head_dim):
    # Block-diagonal matrix P with one copy per head of CroCo's
    # "rotate_half applied to each half of the head dim" permutation-with-sign,
    # so t @ P applies it to all heads at full width.  P is a signed column
    # permutation, so W @ P (done at pack time) loses no precision.
    d2 = head_dim // 2
    qq = d2 // 2
    P = np.zeros((dim, dim), np.float32)
    for hh in range(dim // head_dim):
        base = hh * head_dim
        for j in range(head_dim):
            blk, o = j // d2, j % d2
            if o < qq:
                P[base + blk * d2 + o + qq, base + j] = -1.0
            else:
                P[base + blk * d2 + o - qq, base + j] = 1.0
    return P


def make_params(key):
    ks = jax.random.split(key, 12)
    w = lambda k, shape, s=0.05: (s * jax.random.normal(k, shape)).astype(jnp.float32)
    ones = lambda d: jnp.ones((1, d), jnp.float32)
    zeros = lambda d: jnp.zeros((1, d), jnp.float32)
    return (
        ones(DIM), zeros(DIM),                                   # norm1 gamma/beta
        w(ks[0], (DIM, 3 * DIM)),                                # attn.qkv (qkv_bias=False)
        w(ks[1], (DIM, DIM)), w(ks[2], (1, DIM), 0.02),          # attn.proj W, b
        ones(DIM), zeros(DIM),                                   # norm_y
        ones(DIM), zeros(DIM),                                   # norm2
        w(ks[3], (DIM, DIM)), w(ks[4], (DIM, DIM)),              # cross projq, projk
        w(ks[5], (DIM, DIM)),                                    # cross projv
        w(ks[6], (DIM, DIM)), w(ks[7], (1, DIM), 0.02),          # cross proj W, b
        ones(DIM), zeros(DIM),                                   # norm3
        w(ks[8], (DIM, MLP_HID)), w(ks[9], (1, MLP_HID), 0.02),  # mlp.fc1 W, b
        w(ks[10], (MLP_HID, DIM)), w(ks[11], (1, DIM), 0.02),    # mlp.fc2 W, b
    )


def pack_inputs(x, y, xpos, ypos, params):
    (g1, b1, w_qkv, w_ao, b_ao, gy, by, g2, b2,
     w_q, w_k, w_v, w_co, b_co, g3, b3, w_fc1, b_fc1, w_fc2, b_fc2) = params
    bsz, n, d = x.shape
    m = y.shape[1]
    cosx, sinx = rope2d_cos_sin(xpos, HD)
    cosy, siny = rope2d_cos_sin(ypos, HD)
    # tile cos/sin across heads -> (B*T, DIM) and fold batch into rows
    tile = lambda c: jnp.tile(c, (1, 1, HEADS)).reshape(bsz * c.shape[1], DIM)

    xy = jnp.concatenate([x.reshape(bsz * n, d), y.reshape(bsz * m, d)], axis=0)

    # additive batch mask (0 within batch, -1e30 across batches), padded to DIM lanes
    qb = jnp.repeat(jnp.arange(bsz), n)
    kb = jnp.repeat(jnp.arange(bsz), m)
    mask = jnp.where(qb[:, None] == kb[None, :], 0.0, NEG_INF).astype(jnp.float32)
    mask_pad = jnp.pad(mask, ((0, 0), (0, DIM - bsz * m)))

    rope_mask = jnp.concatenate(
        [tile(cosx), tile(sinx), tile(cosy), tile(siny), mask_pad], axis=0)

    vecs = jnp.concatenate([g1, b1, gy, by, g2, b2, g3, b3, b_ao, b_co, b_fc2], axis=0)

    rot = jnp.asarray(rope_rot_matrix_full(DIM, HD))
    scale = HD ** -0.5
    # self-attn: [q*scale, k, v, (q@rot)*scale, k@rot]  (RoPE + score scale folded in)
    wq, wk, wv = w_qkv[:, 0:DIM], w_qkv[:, DIM:2 * DIM], w_qkv[:, 2 * DIM:3 * DIM]
    w_qkv5 = jnp.concatenate(
        [wq * scale, wk, wv, (wq @ rot) * scale, wk @ rot], axis=1).astype(jnp.bfloat16)
    # cross-attn q: [q*scale, (q@rot)*scale]
    w_cq = jnp.concatenate([w_q * scale, (w_q @ rot) * scale], axis=1).astype(jnp.bfloat16)
    # cross-attn k/v: [k, v, k@rot]
    w_ckv = jnp.concatenate([w_k, w_v, w_k @ rot], axis=1).astype(jnp.bfloat16)
    # row-stacked square slab: [attn proj, cross proj, fc2]
    w_sq = jnp.concatenate([w_ao, w_co, w_fc2], axis=0).astype(jnp.bfloat16)

    return (xy, rope_mask, vecs, b_fc1, w_qkv5, w_cq, w_ckv,
            w_fc1.astype(jnp.bfloat16), w_sq)


def decoder_block_forward(x, y, xpos, ypos, params):
    packed = pack_inputs(x, y, xpos, ypos, params)
    x2d = decoder_block_pallas(packed)
    return x2d.reshape(x.shape), y


# ------------------------------- references ----------------------------------
def decoder_block_reference_packed(x, y, xpos, ypos, params):
    # Pure-JAX run of the *identical* math (same packing, same bf16 casts).
    packed = pack_inputs(x, y, xpos, ypos, params)
    return _forward_math(*packed, recip=lambda t: 1.0 / t).reshape(x.shape)


def decoder_block_reference_f32(x, y, xpos, ypos, params):
    # Independent, torch-style f32 per-head reference (no packing, no bf16,
    # no folded RoPE/scale) mirroring the PyTorch DecoderBlock math.
    (g1, b1, w_qkv, w_ao, b_ao, gy, by, g2, b2,
     w_q, w_k, w_v, w_co, b_co, g3, b3, w_fc1, b_fc1, w_fc2, b_fc2) = params
    cosx, sinx = rope2d_cos_sin(xpos, HD)
    cosy, siny = rope2d_cos_sin(ypos, HD)

    def ln(t, g, b):
        mu = jnp.mean(t, -1, keepdims=True)
        var = jnp.mean(jnp.square(t - mu), -1, keepdims=True)
        return (t - mu) * jax.lax.rsqrt(var + EPS) * g + b

    def rope(t, cos, sin):                       # t: (B, H, T, HD)
        d2 = HD // 2

        def rot_half(u):
            u1, u2 = u[..., :d2 // 2], u[..., d2 // 2:]
            return jnp.concatenate([-u2, u1], axis=-1)

        rot = jnp.concatenate([rot_half(t[..., :d2]), rot_half(t[..., d2:])], axis=-1)
        return t * cos[:, None] + rot * sin[:, None]

    def split(t):
        return t.reshape(t.shape[0], t.shape[1], HEADS, HD).transpose(0, 2, 1, 3)

    def merge(t):
        return t.transpose(0, 2, 1, 3).reshape(t.shape[0], t.shape[2], DIM)

    def mha(q, k, v, cq, sq, ck, sk, w_o, b_o):
        qh, kh, vh = split(q), split(k), split(v)
        qh, kh = rope(qh, cq, sq), rope(kh, ck, sk)
        att = jnp.einsum("bhqd,bhkd->bhqk", qh, kh) * (HD ** -0.5)
        att = jax.nn.softmax(att, axis=-1)
        o = merge(jnp.einsum("bhqk,bhkd->bhqd", att, vh))
        return o @ w_o + b_o

    h = ln(x, g1, b1)
    qkv = h @ w_qkv
    q, k, v = qkv[..., :DIM], qkv[..., DIM:2 * DIM], qkv[..., 2 * DIM:]
    x = x + mha(q, k, v, cosx, sinx, cosx, sinx, w_ao, b_ao)
    y_n = ln(y, gy, by)
    h2 = ln(x, g2, b2)
    x = x + mha(h2 @ w_q, y_n @ w_k, y_n @ w_v, cosx, sinx, cosy, siny, w_co, b_co)
    h3 = ln(x, g3, b3)
    hh = h3 @ w_fc1 + b_fc1
    hh = 0.5 * hh * (1.0 + jax.scipy.special.erf(hh * 0.7071067811865476))
    x = x + hh @ w_fc2 + b_fc2
    return x, y


# ----------------------------------- main ------------------------------------
if __name__ == "__main__":
    key = jax.random.PRNGKey(0)
    kx, ky, kp = jax.random.split(key, 3)
    x = jax.random.normal(kx, (B, N, DIM), jnp.float32)
    y = jax.random.normal(ky, (B, M, DIM), jnp.float32)

    grid = 4  # 4x4 patch grid -> 16 tokens
    yy, xx = jnp.meshgrid(jnp.arange(grid), jnp.arange(grid), indexing="ij")
    pos = jnp.stack([yy.reshape(-1), xx.reshape(-1)], axis=-1).astype(jnp.int32)
    xpos = jnp.broadcast_to(pos, (B, N, 2))
    ypos = jnp.broadcast_to(pos, (B, M, 2))

    params = make_params(kp)

    x_out, y_out = decoder_block_forward(x, y, xpos, ypos, params)
    jax.block_until_ready((x_out, y_out))

    # (1) strict check vs pure-JAX reference running the identical math
    x_strict = decoder_block_reference_packed(x, y, xpos, ypos, params)
    np.testing.assert_allclose(np.asarray(x_out), np.asarray(x_strict),
                               rtol=2e-3, atol=2e-3)
    # (2) looser check vs torch-style f32 per-head reference
    #     (guards folded RoPE / scale / packing / batch-mask / bf16 impact)
    x_f32, _ = decoder_block_reference_f32(x, y, xpos, ypos, params)
    np.testing.assert_allclose(np.asarray(x_out), np.asarray(x_f32),
                               rtol=2e-2, atol=2e-2)
    np.testing.assert_allclose(np.asarray(y_out), np.asarray(y), rtol=0, atol=0)

    print("KERNEL_OK")
</pallas_src>

<mosaic_0001>
module attributes {stable_mosaic.version = 11 : i64} {
  func.func @decoder_block_kernel(%arg0: memref<64x64xf32, #tpu.memory_space<vmem>>, %arg1: memref<160x64xf32, #tpu.memory_space<vmem>>, %arg2: memref<11x64xf32, #tpu.memory_space<vmem>>, %arg3: memref<1x256xf32, #tpu.memory_space<vmem>>, %arg4: memref<64x320xbf16, #tpu.memory_space<vmem>>, %arg5: memref<64x128xbf16, #tpu.memory_space<vmem>>, %arg6: memref<64x192xbf16, #tpu.memory_space<vmem>>, %arg7: memref<64x256xbf16, #tpu.memory_space<vmem>>, %arg8: memref<384x64xbf16, #tpu.memory_space<vmem>>, %arg9: memref<32x64xf32, #tpu.memory_space<vmem>>) attributes {dimension_semantics = [], scalar_prefetch = 0 : i64, scratch_operands = 0 : i64, tpu.core_type = #tpu.core_type<tc>} {
    %c0 = arith.constant 0 : index
    %c0_0 = arith.constant 0 : index
    %0 = vector.load %arg0[%c0, %c0_0] : memref<64x64xf32, #tpu.memory_space<vmem>>, vector<64x64xf32>
    %c0_1 = arith.constant 0 : index
    %c0_2 = arith.constant 0 : index
    %1 = vector.load %arg1[%c0_1, %c0_2] : memref<160x64xf32, #tpu.memory_space<vmem>>, vector<160x64xf32>
    %c0_3 = arith.constant 0 : index
    %c0_4 = arith.constant 0 : index
    %2 = vector.load %arg2[%c0_3, %c0_4] : memref<11x64xf32, #tpu.memory_space<vmem>>, vector<11x64xf32>
    %c0_5 = arith.constant 0 : index
    %c0_6 = arith.constant 0 : index
    %3 = vector.load %arg3[%c0_5, %c0_6] : memref<1x256xf32, #tpu.memory_space<vmem>>, vector<1x256xf32>
    %c0_7 = arith.constant 0 : index
    %c0_8 = arith.constant 0 : index
    %4 = vector.load %arg4[%c0_7, %c0_8] : memref<64x320xbf16, #tpu.memory_space<vmem>>, vector<64x320xbf16>
    %c0_9 = arith.constant 0 : index
    %c0_10 = arith.constant 0 : index
    %5 = vector.load %arg5[%c0_9, %c0_10] : memref<64x128xbf16, #tpu.memory_space<vmem>>, vector<64x128xbf16>
    %c0_11 = arith.constant 0 : index
    %c0_12 = arith.constant 0 : index
    %6 = vector.load %arg6[%c0_11, %c0_12] : memref<64x192xbf16, #tpu.memory_space<vmem>>, vector<64x192xbf16>
    %c0_13 = arith.constant 0 : index
    %c0_14 = arith.constant 0 : index
    %7 = vector.load %arg7[%c0_13, %c0_14] : memref<64x256xbf16, #tpu.memory_space<vmem>>, vector<64x256xbf16>
    %c0_15 = arith.constant 0 : index
    %c0_16 = arith.constant 0 : index
    %8 = vector.load %arg8[%c0_15, %c0_16] : memref<384x64xbf16, #tpu.memory_space<vmem>>, vector<384x64xbf16>
    %9 = vector.extract_strided_slice %0 {offsets = [0, 0], sizes = [32, 64], strides = [1, 1]} : vector<64x64xf32> to vector<32x64xf32>
    %10 = vector.extract_strided_slice %0 {offsets = [32, 0], sizes = [32, 64], strides = [1, 1]} : vector<64x64xf32> to vector<32x64xf32>
    %11 = vector.extract_strided_slice %1 {offsets = [0, 0], sizes = [32, 64], strides = [1, 1]} : vector<160x64xf32> to vector<32x64xf32>
    %12 = vector.extract_strided_slice %1 {offsets = [32, 0], sizes = [32, 64], strides = [1, 1]} : vector<160x64xf32> to vector<32x64xf32>
    %13 = vector.extract_strided_slice %1 {offsets = [64, 0], sizes = [32, 64], strides = [1, 1]} : vector<160x64xf32> to vector<32x64xf32>
    %14 = vector.extract_strided_slice %1 {offsets = [96, 0], sizes = [32, 64], strides = [1, 1]} : vector<160x64xf32> to vector<32x64xf32>
    %15 = vector.extract_strided_slice %1 {offsets = [128, 0], sizes = [32, 32], strides = [1, 1]} : vector<160x64xf32> to vector<32x32xf32>
    %16 = vector.extract_strided_slice %8 {offsets = [0, 0], sizes = [64, 64], strides = [1, 1]} : vector<384x64xbf16> to vector<64x64xbf16>
    %17 = vector.extract_strided_slice %8 {offsets = [64, 0], sizes = [64, 64], strides = [1, 1]} : vector<384x64xbf16> to vector<64x64xbf16>
    %18 = vector.extract_strided_slice %8 {offsets = [128, 0], sizes = [256, 64], strides = [1, 1]} : vector<384x64xbf16> to vector<256x64xbf16>
    %19 = vector.extract_strided_slice %2 {offsets = [0, 0], sizes = [1, 64], strides = [1, 1]} : vector<11x64xf32> to vector<1x64xf32>
    %20 = vector.extract_strided_slice %2 {offsets = [1, 0], sizes = [1, 64], strides = [1, 1]} : vector<11x64xf32> to vector<1x64xf32>
    %21 = vector.extract_strided_slice %2 {offsets = [2, 0], sizes = [1, 64], strides = [1, 1]} : vector<11x64xf32> to vector<1x64xf32>
    %22 = vector.extract_strided_slice %2 {offsets = [3, 0], sizes = [1, 64], strides = [1, 1]} : vector<11x64xf32> to vector<1x64xf32>
    %23 = vector.extract_strided_slice %2 {offsets = [4, 0], sizes = [1, 64], strides = [1, 1]} : vector<11x64xf32> to vector<1x64xf32>
    %24 = vector.extract_strided_slice %2 {offsets = [5, 0], sizes = [1, 64], strides = [1, 1]} : vector<11x64xf32> to vector<1x64xf32>
    %25 = vector.extract_strided_slice %2 {offsets = [6, 0], sizes = [1, 64], strides = [1, 1]} : vector<11x64xf32> to vector<1x64xf32>
    %26 = vector.extract_strided_slice %2 {offsets = [7, 0], sizes = [1, 64], strides = [1, 1]} : vector<11x64xf32> to vector<1x64xf32>
    %27 = vector.extract_strided_slice %2 {offsets = [8, 0], sizes = [1, 64], strides = [1, 1]} : vector<11x64xf32> to vector<1x64xf32>
    %28 = vector.extract_strided_slice %2 {offsets = [9, 0], sizes = [1, 64], strides = [1, 1]} : vector<11x64xf32> to vector<1x64xf32>
    %29 = vector.extract_strided_slice %2 {offsets = [10, 0], sizes = [1, 64], strides = [1, 1]} : vector<11x64xf32> to vector<1x64xf32>
    %cst = arith.constant dense<0.000000e+00> : vector<32xf32>
    %30 = vector.multi_reduction <add>, %9, %cst [1] : vector<32x64xf32> to vector<32xf32>
    %31 = vector.shape_cast %30 : vector<32xf32> to vector<32x1xf32>
    %cst_17 = arith.constant 6.400000e+01 : f32
    %32 = vector.broadcast %cst_17 : f32 to vector<32x1xf32>
    %33 = arith.divf %31, %32 : vector<32x1xf32>
    %34 = vector.broadcast %33 : vector<32x1xf32> to vector<32x64xf32>
    %35 = arith.subf %9, %34 : vector<32x64xf32>
    %36 = arith.mulf %35, %35 : vector<32x64xf32>
    %cst_18 = arith.constant dense<0.000000e+00> : vector<32xf32>
    %37 = vector.multi_reduction <add>, %36, %cst_18 [1] : vector<32x64xf32> to vector<32xf32>
    %38 = vector.shape_cast %37 : vector<32xf32> to vector<32x1xf32>
    %cst_19 = arith.constant 6.400000e+01 : f32
    %39 = vector.broadcast %cst_19 : f32 to vector<32x1xf32>
    %40 = arith.divf %38, %39 : vector<32x1xf32>
    %41 = vector.broadcast %33 : vector<32x1xf32> to vector<32x64xf32>
    %42 = arith.subf %9, %41 : vector<32x64xf32>
    %cst_20 = arith.constant 9.99999997E-7 : f32
    %43 = vector.broadcast %cst_20 : f32 to vector<32x1xf32>
    %44 = arith.addf %40, %43 : vector<32x1xf32>
    %45 = math.rsqrt %44 : vector<32x1xf32>
    %46 = vector.broadcast %45 : vector<32x1xf32> to vector<32x64xf32>
    %47 = arith.mulf %42, %46 : vector<32x64xf32>
    %48 = vector.broadcast %19 : vector<1x64xf32> to vector<32x64xf32>
    %49 = arith.mulf %47, %48 : vector<32x64xf32>
    %50 = vector.broadcast %20 : vector<1x64xf32> to vector<32x64xf32>
    %51 = arith.addf %49, %50 : vector<32x64xf32>
    %52 = arith.truncf %51 : vector<32x64xf32> to vector<32x64xbf16>
    %cst_21 = arith.constant dense<0.000000e+00> : vector<32x320xf32>
    %53 = tpu.matmul %52, %4, %cst_21 {dimension_numbers = #tpu.dot_dimension_numbers<[1], [0], [0], [1], [0, 0, 1, 1], [], []>} : vector<32x64xbf16>, vector<64x320xbf16>, vector<32x320xf32> -> vector<32x320xf32>
    %54 = vector.extract_strided_slice %53 {offsets = [0, 0], sizes = [32, 64], strides = [1, 1]} : vector<32x320xf32> to vector<32x64xf32>
    %55 = arith.mulf %54, %11 : vector<32x64xf32>
    %56 = vector.extract_strided_slice %53 {offsets = [0, 192], sizes = [32, 64], strides = [1, 1]} : vector<32x320xf32> to vector<32x64xf32>
    %57 = arith.mulf %56, %12 : vector<32x64xf32>
    %58 = arith.addf %55, %57 : vector<32x64xf32>
    %59 = vector.extract_strided_slice %53 {offsets = [0, 64], sizes = [32, 64], strides = [1, 1]} : vector<32x320xf32> to vector<32x64xf32>
    %60 = arith.mulf %59, %11 : vector<32x64xf32>
    %61 = vector.extract_strided_slice %53 {offsets = [0, 256], sizes = [32, 64], strides = [1, 1]} : vector<32x320xf32> to vector<32x64xf32>
    %62 = arith.mulf %61, %12 : vector<32x64xf32>
    %63 = arith.addf %60, %62 : vector<32x64xf32>
    %64 = vector.extract_strided_slice %53 {offsets = [0, 128], sizes = [32, 64], strides = [1, 1]} : vector<32x320xf32> to vector<32x64xf32>
    %65 = vector.extract_strided_slice %58 {offsets = [0, 0], sizes = [32, 32], strides = [1, 1]} : vector<32x64xf32> to vector<32x32xf32>
    %66 = vector.extract_strided_slice %63 {offsets = [0, 0], sizes = [32, 32], strides = [1, 1]} : vector<32x64xf32> to vector<32x32xf32>
    %67 = arith.truncf %65 : vector<32x32xf32> to vector<32x32xbf16>
    %68 = arith.truncf %66 : vector<32x32xf32> to vector<32x32xbf16>
    %cst_22 = arith.constant dense<0.000000e+00> : vector<32x32xf32>
    %69 = tpu.matmul %67, %68, %cst_22 {dimension_numbers = #tpu.dot_dimension_numbers<[1], [1], [0], [0], [0, 0, 1, 0], [], []>} : vector<32x32xbf16>, vector<32x32xbf16>, vector<32x32xf32> -> vector<32x32xf32>
    %70 = arith.addf %69, %15 : vector<32x32xf32>
    %cst_23 = arith.constant dense<0xFF800000> : vector<32xf32>
    %71 = vector.multi_reduction <maximumf>, %70, %cst_23 [1] : vector<32x32xf32> to vector<32xf32>
    %72 = vector.shape_cast %71 : vector<32xf32> to vector<32x1xf32>
    %73 = vector.broadcast %72 : vector<32x1xf32> to vector<32x32xf32>
    %74 = arith.subf %70, %73 : vector<32x32xf32>
    %75 = math.exp %74 : vector<32x32xf32>
    %cst_24 = arith.constant dense<0.000000e+00> : vector<32xf32>
    %76 = vector.multi_reduction <add>, %75, %cst_24 [1] : vector<32x32xf32> to vector<32xf32>
    %77 = vector.shape_cast %76 : vector<32xf32> to vector<32x1xf32>
    %78 = tpu.reciprocal %77 {approx = true} : vector<32x1xf32> -> vector<32x1xf32>
    %79 = vector.broadcast %78 : vector<32x1xf32> to vector<32x32xf32>
    %80 = arith.mulf %75, %79 : vector<32x32xf32>
    %81 = vector.extract_strided_slice %64 {offsets = [0, 0], sizes = [32, 32], strides = [1, 1]} : vector<32x64xf32> to vector<32x32xf32>
    %82 = arith.truncf %80 : vector<32x32xf32> to vector<32x32xbf16>
    %83 = arith.truncf %81 : vector<32x32xf32> to vector<32x32xbf16>
    %cst_25 = arith.constant dense<0.000000e+00> : vector<32x32xf32>
    %84 = tpu.matmul %82, %83, %cst_25 {dimension_numbers = #tpu.dot_dimension_numbers<[1], [0], [0], [1], [0, 0, 1, 1], [], []>} : vector<32x32xbf16>, vector<32x32xbf16>, vector<32x32xf32> -> vector<32x32xf32>
    %85 = vector.extract_strided_slice %16 {offsets = [0, 0], sizes = [32, 64], strides = [1, 1]} : vector<64x64xbf16> to vector<32x64xbf16>
    %86 = arith.truncf %84 : vector<32x32xf32> to vector<32x32xbf16>
    %cst_26 = arith.constant dense<0.000000e+00> : vector<32x64xf32>
    %87 = tpu.matmul %86, %85, %cst_26 {dimension_numbers = #tpu.dot_dimension_numbers<[1], [0], [0], [1], [0, 0, 1, 1], [], []>} : vector<32x32xbf16>, vector<32x64xbf16>, vector<32x64xf32> -> vector<32x64xf32>
    %88 = vector.extract_strided_slice %58 {offsets = [0, 32], sizes = [32, 32], strides = [1, 1]} : vector<32x64xf32> to vector<32x32xf32>
    %89 = vector.extract_strided_slice %63 {offsets = [0, 32], sizes = [32, 32], strides = [1, 1]} : vector<32x64xf32> to vector<32x32xf32>
    %90 = arith.truncf %88 : vector<32x32xf32> to vector<32x32xbf16>
    %91 = arith.truncf %89 : vector<32x32xf32> to vector<32x32xbf16>
    %cst_27 = arith.constant dense<0.000000e+00> : vector<32x32xf32>
    %92 = tpu.matmul %90, %91, %cst_27 {dimension_numbers = #tpu.dot_dimension_numbers<[1], [1], [0], [0], [0, 0, 1, 0], [], []>} : vector<32x32xbf16>, vector<32x32xbf16>, vector<32x32xf32> -> vector<32x32xf32>
    %93 = arith.addf %92, %15 : vector<32x32xf32>
    %cst_28 = arith.constant dense<0xFF800000> : vector<32xf32>
    %94 = vector.multi_reduction <maximumf>, %93, %cst_28 [1] : vector<32x32xf32> to vector<32xf32>
    %95 = vector.shape_cast %94 : vector<32xf32> to vector<32x1xf32>
    %96 = vector.broadcast %95 : vector<32x1xf32> to vector<32x32xf32>
    %97 = arith.subf %93, %96 : vector<32x32xf32>
    %98 = math.exp %97 : vector<32x32xf32>
    %cst_29 = arith.constant dense<0.000000e+00> : vector<32xf32>
    %99 = vector.multi_reduction <add>, %98, %cst_29 [1] : vector<32x32xf32> to vector<32xf32>
    %100 = vector.shape_cast %99 : vector<32xf32> to vector<32x1xf32>
    %101 = tpu.reciprocal %100 {approx = true} : vector<32x1xf32> -> vector<32x1xf32>
    %102 = vector.broadcast %101 : vector<32x1xf32> to vector<32x32xf32>
    %103 = arith.mulf %98, %102 : vector<32x32xf32>
    %104 = vector.extract_strided_slice %64 {offsets = [0, 32], sizes = [32, 32], strides = [1, 1]} : vector<32x64xf32> to vector<32x32xf32>
    %105 = arith.truncf %103 : vector<32x32xf32> to vector<32x32xbf16>
    %106 = arith.truncf %104 : vector<32x32xf32> to vector<32x32xbf16>
    %cst_30 = arith.constant dense<0.000000e+00> : vector<32x32xf32>
    %107 = tpu.matmul %105, %106, %cst_30 {dimension_numbers = #tpu.dot_dimension_numbers<[1], [0], [0], [1], [0, 0, 1, 1], [], []>} : vector<32x32xbf16>, vector<32x32xbf16>, vector<32x32xf32> -> vector<32x32xf32>
    %108 = vector.extract_strided_slice %16 {offsets = [32, 0], sizes = [32, 64], strides = [1, 1]} : vector<64x64xbf16> to vector<32x64xbf16>
    %109 = arith.truncf %107 : vector<32x32xf32> to vector<32x32xbf16>
    %cst_31 = arith.constant dense<0.000000e+00> : vector<32x64xf32>
    %110 = tpu.matmul %109, %108, %cst_31 {dimension_numbers = #tpu.dot_dimension_numbers<[1], [0], [0], [1], [0, 0, 1, 1], [], []>} : vector<32x32xbf16>, vector<32x64xbf16>, vector<32x64xf32> -> vector<32x64xf32>
    %111 = arith.addf %87, %110 : vector<32x64xf32>
    %112 = vector.broadcast %27 : vector<1x64xf32> to vector<32x64xf32>
    %113 = arith.addf %111, %112 : vector<32x64xf32>
    %114 = arith.addf %9, %113 : vector<32x64xf32>
    %cst_32 = arith.constant dense<0.000000e+00> : vector<32xf32>
    %115 = vector.multi_reduction <add>, %10, %cst_32 [1] : vector<32x64xf32> to vector<32xf32>
    %116 = vector.shape_cast %115 : vector<32xf32> to vector<32x1xf32>
    %cst_33 = arith.constant 6.400000e+01 : f32
    %117 = vector.broadcast %cst_33 : f32 to vector<32x1xf32>
    %118 = arith.divf %116, %117 : vector<32x1xf32>
    %119 = vector.broadcast %118 : vector<32x1xf32> to vector<32x64xf32>
    %120 = arith.subf %10, %119 : vector<32x64xf32>
    %121 = arith.mulf %120, %120 : vector<32x64xf32>
    %cst_34 = arith.constant dense<0.000000e+00> : vector<32xf32>
    %122 = vector.multi_reduction <add>, %121, %cst_34 [1] : vector<32x64xf32> to vector<32xf32>
    %123 = vector.shape_cast %122 : vector<32xf32> to vector<32x1xf32>
    %cst_35 = arith.constant 6.400000e+01 : f32
    %124 = vector.broadcast %cst_35 : f32 to vector<32x1xf32>
    %125 = arith.divf %123, %124 : vector<32x1xf32>
    %126 = vector.broadcast %118 : vector<32x1xf32> to vector<32x64xf32>
    %127 = arith.subf %10, %126 : vector<32x64xf32>
    %cst_36 = arith.constant 9.99999997E-7 : f32
    %128 = vector.broadcast %cst_36 : f32 to vector<32x1xf32>
    %129 = arith.addf %125, %128 : vector<32x1xf32>
    %130 = math.rsqrt %129 : vector<32x1xf32>
    %131 = vector.broadcast %130 : vector<32x1xf32> to vector<32x64xf32>
    %132 = arith.mulf %127, %131 : vector<32x64xf32>
    %133 = vector.broadcast %21 : vector<1x64xf32> to vector<32x64xf32>
    %134 = arith.mulf %132, %133 : vector<32x64xf32>
    %135 = vector.broadcast %22 : vector<1x64xf32> to vector<32x64xf32>
    %136 = arith.addf %134, %135 : vector<32x64xf32>
    %cst_37 = arith.constant dense<0.000000e+00> : vector<32xf32>
    %137 = vector.multi_reduction <add>, %114, %cst_37 [1] : vector<32x64xf32> to vector<32xf32>
    %138 = vector.shape_cast %137 : vector<32xf32> to vector<32x1xf32>
    %cst_38 = arith.constant 6.400000e+01 : f32
    %139 = vector.broadcast %cst_38 : f32 to vector<32x1xf32>
    %140 = arith.divf %138, %139 : vector<32x1xf32>
    %141 = vector.broadcast %140 : vector<32x1xf32> to vector<32x64xf32>
    %142 = arith.subf %114, %141 : vector<32x64xf32>
    %143 = arith.mulf %142, %142 : vector<32x64xf32>
    %cst_39 = arith.constant dense<0.000000e+00> : vector<32xf32>
    %144 = vector.multi_reduction <add>, %143, %cst_39 [1] : vector<32x64xf32> to vector<32xf32>
    %145 = vector.shape_cast %144 : vector<32xf32> to vector<32x1xf32>
    %cst_40 = arith.constant 6.400000e+01 : f32
    %146 = vector.broadcast %cst_40 : f32 to vector<32x1xf32>
    %147 = arith.divf %145, %146 : vector<32x1xf32>
    %148 = vector.broadcast %140 : vector<32x1xf32> to vector<32x64xf32>
    %149 = arith.subf %114, %148 : vector<32x64xf32>
    %cst_41 = arith.constant 9.99999997E-7 : f32
    %150 = vector.broadcast %cst_41 : f32 to vector<32x1xf32>
    %151 = arith.addf %147, %150 : vector<32x1xf32>
    %152 = math.rsqrt %151 : vector<32x1xf32>
    %153 = vector.broadcast %152 : vector<32x1xf32> to vector<32x64xf32>
    %154 = arith.mulf %149, %153 : vector<32x64xf32>
    %155 = vector.broadcast %23 : vector<1x64xf32> to vector<32x64xf32>
    %156 = arith.mulf %154, %155 : vector<32x64xf32>
    %157 = vector.broadcast %24 : vector<1x64xf32> to vector<32x64xf32>
    %158 = arith.addf %156, %157 : vector<32x64xf32>
    %159 = arith.truncf %158 : vector<32x64xf32> to vector<32x64xbf16>
    %cst_42 = arith.constant dense<0.000000e+00> : vector<32x128xf32>
    %160 = tpu.matmul %159, %5, %cst_42 {dimension_numbers = #tpu.dot_dimension_numbers<[1], [0], [0], [1], [0, 0, 1, 1], [], []>} : vector<32x64xbf16>, vector<64x128xbf16>, vector<32x128xf32> -> vector<32x128xf32>
    %161 = vector.extract_strided_slice %160 {offsets = [0, 0], sizes = [32, 64], strides = [1, 1]} : vector<32x128xf32> to vector<32x64xf32>
    %162 = arith.mulf %161, %11 : vector<32x64xf32>
    %163 = vector.extract_strided_slice %160 {offsets = [0, 64], sizes = [32, 64], strides = [1, 1]} : vector<32x128xf32> to vector<32x64xf32>
    %164 = arith.mulf %163, %12 : vector<32x64xf32>
    %165 = arith.addf %162, %164 : vector<32x64xf32>
    %166 = arith.truncf %136 : vector<32x64xf32> to vector<32x64xbf16>
    %cst_43 = arith.constant dense<0.000000e+00> : vector<32x192xf32>
    %167 = tpu.matmul %166, %6, %cst_43 {dimension_numbers = #tpu.dot_dimension_numbers<[1], [0], [0], [1], [0, 0, 1, 1], [], []>} : vector<32x64xbf16>, vector<64x192xbf16>, vector<32x192xf32> -> vector<32x192xf32>
    %168 = vector.extract_strided_slice %167 {offsets = [0, 0], sizes = [32, 64], strides = [1, 1]} : vector<32x192xf32> to vector<32x64xf32>
    %169 = arith.mulf %168, %13 : vector<32x64xf32>
    %170 = vector.extract_strided_slice %167 {offsets = [0, 128], sizes = [32, 64], strides = [1, 1]} : vector<32x192xf32> to vector<32x64xf32>
    %171 = arith.mulf %170, %14 : vector<32x64xf32>
    %172 = arith.addf %169, %171 : vector<32x64xf32>
    %173 = vector.extract_strided_slice %167 {offsets = [0, 64], sizes = [32, 64], strides = [1, 1]} : vector<32x192xf32> to vector<32x64xf32>
    %174 = vector.extract_strided_slice %165 {offsets = [0, 0], sizes = [32, 32], strides = [1, 1]} : vector<32x64xf32> to vector<32x32xf32>
    %175 = vector.extract_strided_slice %172 {offsets = [0, 0], sizes = [32, 32], strides = [1, 1]} : vector<32x64xf32> to vector<32x32xf32>
    %176 = arith.truncf %174 : vector<32x32xf32> to vector<32x32xbf16>
    %177 = arith.truncf %175 : vector<32x32xf32> to vector<32x32xbf16>
    %cst_44 = arith.constant dense<0.000000e+00> : vector<32x32xf32>
    %178 = tpu.matmul %176, %177, %cst_44 {dimension_numbers = #tpu.dot_dimension_numbers<[1], [1], [0], [0], [0, 0, 1, 0], [], []>} : vector<32x32xbf16>, vector<32x32xbf16>, vector<32x32xf32> -> vector<32x32xf32>
    %179 = arith.addf %178, %15 : vector<32x32xf32>
    %cst_45 = arith.constant dense<0xFF800000> : vector<32xf32>
    %180 = vector.multi_reduction <maximumf>, %179, %cst_45 [1] : vector<32x32xf32> to vector<32xf32>
    %181 = vector.shape_cast %180 : vector<32xf32> to vector<32x1xf32>
    %182 = vector.broadcast %181 : vector<32x1xf32> to vector<32x32xf32>
    %183 = arith.subf %179, %182 : vector<32x32xf32>
    %184 = math.exp %183 : vector<32x32xf32>
    %cst_46 = arith.constant dense<0.000000e+00> : vector<32xf32>
    %185 = vector.multi_reduction <add>, %184, %cst_46 [1] : vector<32x32xf32> to vector<32xf32>
    %186 = vector.shape_cast %185 : vector<32xf32> to vector<32x1xf32>
    %187 = tpu.reciprocal %186 {approx = true} : vector<32x1xf32> -> vector<32x1xf32>
    %188 = vector.broadcast %187 : vector<32x1xf32> to vector<32x32xf32>
    %189 = arith.mulf %184, %188 : vector<32x32xf32>
    %190 = vector.extract_strided_slice %173 {offsets = [0, 0], sizes = [32, 32], strides = [1, 1]} : vector<32x64xf32> to vector<32x32xf32>
    %191 = arith.truncf %189 : vector<32x32xf32> to vector<32x32xbf16>
    %192 = arith.truncf %190 : vector<32x32xf32> to vector<32x32xbf16>
    %cst_47 = arith.constant dense<0.000000e+00> : vector<32x32xf32>
    %193 = tpu.matmul %191, %192, %cst_47 {dimension_numbers = #tpu.dot_dimension_numbers<[1], [0], [0], [1], [0, 0, 1, 1], [], []>} : vector<32x32xbf16>, vector<32x32xbf16>, vector<32x32xf32> -> vector<32x32xf32>
    %194 = vector.extract_strided_slice %17 {offsets = [0, 0], sizes = [32, 64], strides = [1, 1]} : vector<64x64xbf16> to vector<32x64xbf16>
    %195 = arith.truncf %193 : vector<32x32xf32> to vector<32x32xbf16>
    %cst_48 = arith.constant dense<0.000000e+00> : vector<32x64xf32>
    %196 = tpu.matmul %195, %194, %cst_48 {dimension_numbers = #tpu.dot_dimension_numbers<[1], [0], [0], [1], [0, 0, 1, 1], [], []>} : vector<32x32xbf16>, vector<32x64xbf16>, vector<32x64xf32> -> vector<32x64xf32>
    %197 = vector.extract_strided_slice %165 {offsets = [0, 32], sizes = [32, 32], strides = [1, 1]} : vector<32x64xf32> to vector<32x32xf32>
    %198 = vector.extract_strided_slice %172 {offsets = [0, 32], sizes = [32, 32], strides = [1, 1]} : vector<32x64xf32> to vector<32x32xf32>
    %199 = arith.truncf %197 : vector<32x32xf32> to vector<32x32xbf16>
    %200 = arith.truncf %198 : vector<32x32xf32> to vector<32x32xbf16>
    %cst_49 = arith.constant dense<0.000000e+00> : vector<32x32xf32>
    %201 = tpu.matmul %199, %200, %cst_49 {dimension_numbers = #tpu.dot_dimension_numbers<[1], [1], [0], [0], [0, 0, 1, 0], [], []>} : vector<32x32xbf16>, vector<32x32xbf16>, vector<32x32xf32> -> vector<32x32xf32>
    %202 = arith.addf %201, %15 : vector<32x32xf32>
    %cst_50 = arith.constant dense<0xFF800000> : vector<32xf32>
    %203 = vector.multi_reduction <maximumf>, %202, %cst_50 [1] : vector<32x32xf32> to vector<32xf32>
    %204 = vector.shape_cast %203 : vector<32xf32> to vector<32x1xf32>
    %205 = vector.broadcast %204 : vector<32x1xf32> to vector<32x32xf32>
    %206 = arith.subf %202, %205 : vector<32x32xf32>
    %207 = math.exp %206 : vector<32x32xf32>
    %cst_51 = arith.constant dense<0.000000e+00> : vector<32xf32>
    %208 = vector.multi_reduction <add>, %207, %cst_51 [1] : vector<32x32xf32> to vector<32xf32>
    %209 = vector.shape_cast %208 : vector<32xf32> to vector<32x1xf32>
    %210 = tpu.reciprocal %209 {approx = true} : vector<32x1xf32> -> vector<32x1xf32>
    %211 = vector.broadcast %210 : vector<32x1xf32> to vector<32x32xf32>
    %212 = arith.mulf %207, %211 : vector<32x32xf32>
    %213 = vector.extract_strided_slice %173 {offsets = [0, 32], sizes = [32, 32], strides = [1, 1]} : vector<32x64xf32> to vector<32x32xf32>
    %214 = arith.truncf %212 : vector<32x32xf32> to vector<32x32xbf16>
    %215 = arith.truncf %213 : vector<32x32xf32> to vector<32x32xbf16>
    %cst_52 = arith.constant dense<0.000000e+00> : vector<32x32xf32>
    %216 = tpu.matmul %214, %215, %cst_52 {dimension_numbers = #tpu.dot_dimension_numbers<[1], [0], [0], [1], [0, 0, 1, 1], [], []>} : vector<32x32xbf16>, vector<32x32xbf16>, vector<32x32xf32> -> vector<32x32xf32>
    %217 = vector.extract_strided_slice %17 {offsets = [32, 0], sizes = [32, 64], strides = [1, 1]} : vector<64x64xbf16> to vector<32x64xbf16>
    %218 = arith.truncf %216 : vector<32x32xf32> to vector<32x32xbf16>
    %cst_53 = arith.constant dense<0.000000e+00> : vector<32x64xf32>
    %219 = tpu.matmul %218, %217, %cst_53 {dimension_numbers = #tpu.dot_dimension_numbers<[1], [0], [0], [1], [0, 0, 1, 1], [], []>} : vector<32x32xbf16>, vector<32x64xbf16>, vector<32x64xf32> -> vector<32x64xf32>
    %220 = arith.addf %196, %219 : vector<32x64xf32>
    %221 = vector.broadcast %28 : vector<1x64xf32> to vector<32x64xf32>
    %222 = arith.addf %220, %221 : vector<32x64xf32>
    %223 = arith.addf %114, %222 : vector<32x64xf32>
    %cst_54 = arith.constant dense<0.000000e+00> : vector<32xf32>
    %224 = vector.multi_reduction <add>, %223, %cst_54 [1] : vector<32x64xf32> to vector<32xf32>
    %225 = vector.shape_cast %224 : vector<32xf32> to vector<32x1xf32>
    %cst_55 = arith.constant 6.400000e+01 : f32
    %226 = vector.broadcast %cst_55 : f32 to vector<32x1xf32>
    %227 = arith.divf %225, %226 : vector<32x1xf32>
    %228 = vector.broadcast %227 : vector<32x1xf32> to vector<32x64xf32>
    %229 = arith.subf %223, %228 : vector<32x64xf32>
    %230 = arith.mulf %229, %229 : vector<32x64xf32>
    %cst_56 = arith.constant dense<0.000000e+00> : vector<32xf32>
    %231 = vector.multi_reduction <add>, %230, %cst_56 [1] : vector<32x64xf32> to vector<32xf32>
    %232 = vector.shape_cast %231 : vector<32xf32> to vector<32x1xf32>
    %cst_57 = arith.constant 6.400000e+01 : f32
    %233 = vector.broadcast %cst_57 : f32 to vector<32x1xf32>
    %234 = arith.divf %232, %233 : vector<32x1xf32>
    %235 = vector.broadcast %227 : vector<32x1xf32> to vector<32x64xf32>
    %236 = arith.subf %223, %235 : vector<32x64xf32>
    %cst_58 = arith.constant 9.99999997E-7 : f32
    %237 = vector.broadcast %cst_58 : f32 to vector<32x1xf32>
    %238 = arith.addf %234, %237 : vector<32x1xf32>
    %239 = math.rsqrt %238 : vector<32x1xf32>
    %240 = vector.broadcast %239 : vector<32x1xf32> to vector<32x64xf32>
    %241 = arith.mulf %236, %240 : vector<32x64xf32>
    %242 = vector.broadcast %25 : vector<1x64xf32> to vector<32x64xf32>
    %243 = arith.mulf %241, %242 : vector<32x64xf32>
    %244 = vector.broadcast %26 : vector<1x64xf32> to vector<32x64xf32>
    %245 = arith.addf %243, %244 : vector<32x64xf32>
    %246 = arith.truncf %245 : vector<32x64xf32> to vector<32x64xbf16>
    %cst_59 = arith.constant dense<0.000000e+00> : vector<32x256xf32>
    %247 = tpu.matmul %246, %7, %cst_59 {dimension_numbers = #tpu.dot_dimension_numbers<[1], [0], [0], [1], [0, 0, 1, 1], [], []>} : vector<32x64xbf16>, vector<64x256xbf16>, vector<32x256xf32> -> vector<32x256xf32>
    %248 = vector.broadcast %3 : vector<1x256xf32> to vector<32x256xf32>
    %249 = arith.addf %247, %248 : vector<32x256xf32>
    %cst_60 = arith.constant 5.000000e-01 : f32
    %250 = vector.broadcast %cst_60 : f32 to vector<32x256xf32>
    %251 = arith.mulf %250, %249 : vector<32x256xf32>
    %cst_61 = arith.constant 0.707106769 : f32
    %252 = vector.broadcast %cst_61 : f32 to vector<32x256xf32>
    %253 = arith.mulf %249, %252 : vector<32x256xf32>
    %254 = math.absf %253 : vector<32x256xf32>
    %cst_62 = arith.constant 5.000000e-01 : f32
    %255 = vector.broadcast %cst_62 : f32 to vector<32x256xf32>
    %256 = arith.mulf %255, %254 : vector<32x256xf32>
    %cst_63 = arith.constant 1.000000e+00 : f32
    %257 = vector.broadcast %cst_63 : f32 to vector<32x256xf32>
    %258 = arith.addf %257, %256 : vector<32x256xf32>
    %cst_64 = arith.constant 1.000000e+00 : f32
    %259 = vector.broadcast %cst_64 : f32 to vector<32x256xf32>
    %260 = arith.divf %259, %258 : vector<32x256xf32>
    %cst_65 = arith.constant 0.170872763 : f32
    %261 = vector.broadcast %cst_65 : f32 to vector<32x256xf32>
    %262 = arith.mulf %260, %261 : vector<32x256xf32>
    %cst_66 = arith.constant -0.822152256 : f32
    %263 = vector.broadcast %cst_66 : f32 to vector<32x256xf32>
    %264 = arith.addf %263, %262 : vector<32x256xf32>
    %265 = arith.mulf %260, %264 : vector<32x256xf32>
    %cst_67 = arith.constant 1.48851585 : f32
    %266 = vector.broadcast %cst_67 : f32 to vector<32x256xf32>
    %267 = arith.addf %266, %265 : vector<32x256xf32>
    %268 = arith.mulf %260, %267 : vector<32x256xf32>
    %cst_68 = arith.constant -1.13520396 : f32
    %269 = vector.broadcast %cst_68 : f32 to vector<32x256xf32>
    %270 = arith.addf %269, %268 : vector<32x256xf32>
    %271 = arith.mulf %260, %270 : vector<32x256xf32>
    %cst_69 = arith.constant 0.278868079 : f32
    %272 = vector.broadcast %cst_69 : f32 to vector<32x256xf32>
    %273 = arith.addf %272, %271 : vector<32x256xf32>
    %274 = arith.mulf %260, %273 : vector<32x256xf32>
    %cst_70 = arith.constant -0.186288059 : f32
    %275 = vector.broadcast %cst_70 : f32 to vector<32x256xf32>
    %276 = arith.addf %275, %274 : vector<32x256xf32>
    %277 = arith.mulf %260, %276 : vector<32x256xf32>
    %cst_71 = arith.constant 0.0967841818 : f32
    %278 = vector.broadcast %cst_71 : f32 to vector<32x256xf32>
    %279 = arith.addf %278, %277 : vector<32x256xf32>
    %280 = arith.mulf %260, %279 : vector<32x256xf32>
    %cst_72 = arith.constant 0.374091953 : f32
    %281 = vector.broadcast %cst_72 : f32 to vector<32x256xf32>
    %282 = arith.addf %281, %280 : vector<32x256xf32>
    %283 = arith.mulf %260, %282 : vector<32x256xf32>
    %cst_73 = arith.constant 1.00002372 : f32
    %284 = vector.broadcast %cst_73 : f32 to vector<32x256xf32>
    %285 = arith.addf %284, %283 : vector<32x256xf32>
    %286 = arith.mulf %260, %285 : vector<32x256xf32>
    %cst_74 = arith.constant -1.26551223 : f32
    %287 = vector.broadcast %cst_74 : f32 to vector<32x256xf32>
    %288 = arith.addf %287, %286 : vector<32x256xf32>
    %cst_75 = arith.constant 0.000000e+00 : f32
    %289 = vector.broadcast %cst_75 : f32 to vector<32x256xf32>
    %290 = arith.subf %289, %254 : vector<32x256xf32>
    %291 = arith.mulf %290, %254 : vector<32x256xf32>
    %292 = arith.addf %291, %288 : vector<32x256xf32>
    %293 = math.exp %292 : vector<32x256xf32>
    %294 = arith.mulf %260, %293 : vector<32x256xf32>
    %cst_76 = arith.constant 0.000000e+00 : f32
    %295 = vector.broadcast %cst_76 : f32 to vector<32x256xf32>
    %296 = arith.cmpf oge, %253, %295 : vector<32x256xf32>
    %cst_77 = arith.constant 1.000000e+00 : f32
    %297 = vector.broadcast %cst_77 : f32 to vector<32x256xf32>
    %298 = arith.subf %297, %294 : vector<32x256xf32>
    %cst_78 = arith.constant 1.000000e+00 : f32
    %299 = vector.broadcast %cst_78 : f32 to vector<32x256xf32>
    %300 = arith.subf %294, %299 : vector<32x256xf32>
    %301 = arith.select %296, %298, %300 : vector<32x256xi1>, vector<32x256xf32>
    %cst_79 = arith.constant 1.000000e+00 : f32
    %302 = vector.broadcast %cst_79 : f32 to vector<32x256xf32>
    %303 = arith.addf %302, %301 : vector<32x256xf32>
    %304 = arith.mulf %251, %303 : vector<32x256xf32>
    %305 = arith.truncf %304 : vector<32x256xf32> to vector<32x256xbf16>
    %cst_80 = arith.constant dense<0.000000e+00> : vector<32x64xf32>
    %306 = tpu.matmul %305, %18, %cst_80 {dimension_numbers = #tpu.dot_dimension_numbers<[1], [0], [0], [1], [0, 0, 1, 1], [], []>} : vector<32x256xbf16>, vector<256x64xbf16>, vector<32x64xf32> -> vector<32x64xf32>
    %307 = arith.addf %223, %306 : vector<32x64xf32>
    %308 = vector.broadcast %29 : vector<1x64xf32> to vector<32x64xf32>
    %309 = arith.addf %307, %308 : vector<32x64xf32>
    %c0_81 = arith.constant 0 : index
    %c0_82 = arith.constant 0 : index
    %310 = vector.load %arg9[%c0_81, %c0_82] : memref<32x64xf32, #tpu.memory_space<vmem>>, vector<32x64xf32>
    tpu.vector_store %arg9[%c0_81, %c0_82], %309 {strides = array<i32>} : memref<32x64xf32, #tpu.memory_space<vmem>>, vector<32x64xf32>,
    return
  }
}

</mosaic_0001>

<llo_original>
// kernel: tpu_custom_call.1
$region0: #{tpu_custom_call.1}
  #allocation0 [shape = 'u32[]', space=smem, size = 0x4, offset = 0x4, fixed_abs, tag = 'smem constant byte address 0x4 - core index']
  #allocation1 [shape = 'u32[72,128]{1,0:T(1,128)}', space=vmem, size = 0x9000, scoped, tag = 'internal scratch']
  %s0 = inlined_call_operand.vmem [shape: f32[64,64], index: 0, kind: input, shape index: {}]
  %s1 = inlined_call_operand.vmem [shape: f32[160,64], index: 1, kind: input, shape index: {}]
  %s2 = inlined_call_operand.vmem [shape: f32[11,64], index: 2, kind: input, shape index: {}]
  %s3 = inlined_call_operand.vmem [shape: f32[1,256], index: 3, kind: input, shape index: {}]
  %s4 = inlined_call_operand.vmem [shape: bf16[64,320], index: 4, kind: input, shape index: {}]
  %s5 = inlined_call_operand.vmem [shape: bf16[64,128], index: 5, kind: input, shape index: {}]
  %s6 = inlined_call_operand.vmem [shape: bf16[64,192], index: 6, kind: input, shape index: {}]
  %s7 = inlined_call_operand.vmem [shape: bf16[64,256], index: 7, kind: input, shape index: {}]
  %s8 = inlined_call_operand.vmem [shape: bf16[384,64], index: 8, kind: input, shape index: {}]
  %s9 = inlined_call_operand.hbm [shape: f32[32,64], index: 9, kind: output, shape index: {}]
  %s10 = sld [smem:[#allocation0]]
  $region46: #{tpu_custom_call.1} parent=0
    _
  %s12 = ssub.s32 1, %s10
  %s13 = scalar_select 0, %s12, %s10
  $region1: #{tpu_custom_call.1} parent=0
    #allocation2 [shape = 'u8[16384]{0}', space=vmem, size = 0x4000, scoped, tag = 'output window, operand 0, single buffered']
    #allocation3 [shape = 's32[1]{0}', space=sflag, size = 0x4, scoped, tag = 'scoped memory for tpu_custom_call.1']
    %14 = vsyncpa [#allocation3], 0
    // Predicated region
    $region2: #{tpu_custom_call.1} parent=1 // pred_check
      _
    $region3: #{tpu_custom_call.1} parent=1 // pred_check_branch
      %16 = sbr.rel (0) target = $region5
    $region4: #{tpu_custom_call.1} parent=1 // pred_region
      _
    $region5: #{tpu_custom_call.1} parent=1 // pred_fallthru
      _
    // Predicated region
    $region6: #{tpu_custom_call.1} parent=1 // pred_check
      _
    $region7: #{tpu_custom_call.1} parent=1 // pred_check_branch
      %18 = sbr.rel (0) target = $region9
    $region8: #{tpu_custom_call.1} parent=1 // pred_region
      _
    $region9: #{tpu_custom_call.1} parent=1 // pred_fallthru
      _
    // Predicated region
    $region10: #{tpu_custom_call.1} parent=1 // pred_check
      _
    $region11: #{tpu_custom_call.1} parent=1 // pred_check_branch
      %20 = sbr.rel (0) target = $region13
    $region12: #{tpu_custom_call.1} parent=1 // pred_region
      _
    $region13: #{tpu_custom_call.1} parent=1 // pred_fallthru
      _
    // Predicated region
    $region14: #{tpu_custom_call.1} parent=1 // pred_check
      _
    $region15: #{tpu_custom_call.1} parent=1 // pred_check_branch
      %22 = sbr.rel (0) target = $region17
    $region16: #{tpu_custom_call.1} parent=1 // pred_region
      _
    $region17: #{tpu_custom_call.1} parent=1 // pred_fallthru
      _
    // Predicated region
    $region18: #{tpu_custom_call.1} parent=1 // pred_check
      _
    $region19: #{tpu_custom_call.1} parent=1 // pred_check_branch
      %24 = sbr.rel (0) target = $region21
    $region20: #{tpu_custom_call.1} parent=1 // pred_region
      _
    $region21: #{tpu_custom_call.1} parent=1 // pred_fallthru
      _
    // Predicated region
    $region22: #{tpu_custom_call.1} parent=1 // pred_check
      _
    $region23: #{tpu_custom_call.1} parent=1 // pred_check_branch
      %26 = sbr.rel (0) target = $region25
    $region24: #{tpu_custom_call.1} parent=1 // pred_region
      _
    $region25: #{tpu_custom_call.1} parent=1 // pred_fallthru
      _
    // Predicated region
    $region26: #{tpu_custom_call.1} parent=1 // pred_check
      _
    $region27: #{tpu_custom_call.1} parent=1 // pred_check_branch
      %28 = sbr.rel (0) target = $region29
    $region28: #{tpu_custom_call.1} parent=1 // pred_region
      _
    $region29: #{tpu_custom_call.1} parent=1 // pred_fallthru
      _
    // Predicated region
    $region30: #{tpu_custom_call.1} parent=1 // pred_check
      _
    $region31: #{tpu_custom_call.1} parent=1 // pred_check_branch
      %30 = sbr.rel (0) target = $region33
    $region32: #{tpu_custom_call.1} parent=1 // pred_region
      _
    $region33: #{tpu_custom_call.1} parent=1 // pred_fallthru
      _
    // Predicated region
    $region34: #{tpu_custom_call.1} parent=1 // pred_check
      _
    $region35: #{tpu_custom_call.1} parent=1 // pred_check_branch
      %32 = sbr.rel (0) target = $region37
    $region36: #{tpu_custom_call.1} parent=1 // pred_region
      _
    $region37: #{tpu_custom_call.1} parent=1 // pred_fallthru
      _
    %v34 = vld [vmem:[%s0] sm:$0xff]
    %v35 = vld [vmem:[%s0 + $0x8] sm:$0xff]
    %v36 = vld [vmem:[%s0 + $0x10] sm:$0xff]
    %v37 = vld [vmem:[%s0 + $0x18] sm:$0xff]
    %v38 = vld [vmem:[%s0 + $0x20] sm:$0xff]
    %v39 = vld [vmem:[%s0 + $0x28] sm:$0xff]
    %v40 = vld [vmem:[%s0 + $0x30] sm:$0xff]
    %v41 = vld [vmem:[%s0 + $0x38] sm:$0xff]
    %v42 = vld [vmem:[%s1] sm:$0xff]
    %v43 = vld [vmem:[%s1 + $0x8] sm:$0xff]
    %v44 = vld [vmem:[%s1 + $0x10] sm:$0xff]
    %v45 = vld [vmem:[%s1 + $0x18] sm:$0xff]
    %v46 = vld [vmem:[%s1 + $0x20] sm:$0xff]
    %v47 = vld [vmem:[%s1 + $0x28] sm:$0xff]
    %v48 = vld [vmem:[%s1 + $0x30] sm:$0xff]
    %v49 = vld [vmem:[%s1 + $0x38] sm:$0xff]
    %v50 = vld [vmem:[%s1 + $0x40] sm:$0xff]
    %v51 = vld [vmem:[%s1 + $0x48] sm:$0xff]
    %v52 = vld [vmem:[%s1 + $0x50] sm:$0xff]
    %v53 = vld [vmem:[%s1 + $0x58] sm:$0xff]
    %v54 = vld [vmem:[%s1 + $0x60] sm:$0xff]
    %v55 = vld [vmem:[%s1 + $0x68] sm:$0xff]
    %v56 = vld [vmem:[%s1 + $0x70] sm:$0xff]
    %v57 = vld [vmem:[%s1 + $0x78] sm:$0xff]
    %v58 = vld [vmem:[%s1 + $0x80] sm:$0xff]
    %v59 = vld [vmem:[%s1 + $0x88] sm:$0xff]
    %v60 = vld [vmem:[%s1 + $0x90] sm:$0xff]
    %v61 = vld [vmem:[%s1 + $0x98] sm:$0xff]
    %v62 = vld [vmem:[%s2] sm:$0xff]
    %v63 = vld [vmem:[%s2 + $0x8] sm:$0x7]
    %v64 = vld [vmem:[%s3] sm:$0x3]
    %v65 = vld [vmem:[%s4] sm:$0xff]
    %v66 = vld [vmem:[%s4 + $0x8] sm:$0xf]
    %v67 = vld [vmem:[%s4 + $0xc] sm:$0xff]
    %v68 = vld [vmem:[%s4 + $0x14] sm:$0xf]
    %v69 = vld [vmem:[%s4 + $0x18] sm:$0xff]
    %v70 = vld [vmem:[%s4 + $0x20] sm:$0xf]
    %v71 = vld [vmem:[%s4 + $0x24] sm:$0xff]
    %v72 = vld [vmem:[%s4 + $0x2c] sm:$0xf]
    %v73 = vld [vmem:[%s4 + $0x30] sm:$0xff]
    %v74 = vld [vmem:[%s4 + $0x38] sm:$0xf]
    %v75 = vld [vmem:[%s4 + $0x3c] sm:$0xff]
    %v76 = vld [vmem:[%s4 + $0x44] sm:$0xf]
    %v77 = vld [vmem:[%s4 + $0x48] sm:$0xff]
    %v78 = vld [vmem:[%s4 + $0x50] sm:$0xf]
    %v79 = vld [vmem:[%s4 + $0x54] sm:$0xff]
    %v80 = vld [vmem:[%s4 + $0x5c] sm:$0xf]
    %v81 = vld [vmem:[%s5] sm:$0xf]
    %v82 = vld [vmem:[%s5 + $0x4] sm:$0xf]
    %v83 = vld [vmem:[%s5 + $0x8] sm:$0xf]
    %v84 = vld [vmem:[%s5 + $0xc] sm:$0xf]
    %v85 = vld [vmem:[%s5 + $0x10] sm:$0xf]
    %v86 = vld [vmem:[%s5 + $0x14] sm:$0xf]
    %v87 = vld [vmem:[%s5 + $0x18] sm:$0xf]
    %v88 = vld [vmem:[%s5 + $0x1c] sm:$0xf]
    %v89 = vld [vmem:[%s6] sm:$0xff]
    %v90 = vld [vmem:[%s6 + $0x8] sm:$0xff]
    %v91 = vld [vmem:[%s6 + $0x10] sm:$0xff]
    %v92 = vld [vmem:[%s6 + $0x18] sm:$0xff]
    %v93 = vld [vmem:[%s6 + $0x20] sm:$0xff]
    %v94 = vld [vmem:[%s6 + $0x28] sm:$0xff]
    %v95 = vld [vmem:[%s6 + $0x30] sm:$0xff]
    %v96 = vld [vmem:[%s6 + $0x38] sm:$0xff]
    %v97 = vld [vmem:[%s7] sm:$0xff]
    %v98 = vld [vmem:[%s7 + $0x8] sm:$0xff]
    %v99 = vld [vmem:[%s7 + $0x10] sm:$0xff]
    %v100 = vld [vmem:[%s7 + $0x18] sm:$0xff]
    %v101 = vld [vmem:[%s7 + $0x20] sm:$0xff]
    %v102 = vld [vmem:[%s7 + $0x28] sm:$0xff]
    %v103 = vld [vmem:[%s7 + $0x30] sm:$0xff]
    %v104 = vld [vmem:[%s7 + $0x38] sm:$0xff]
    %v105 = vld [vmem:[%s8] sm:$0xf]
    %v106 = vld [vmem:[%s8 + $0x4] sm:$0xf]
    %v107 = vld [vmem:[%s8 + $0x8] sm:$0xf]
    %v108 = vld [vmem:[%s8 + $0xc] sm:$0xf]
    %v109 = vld [vmem:[%s8 + $0x10] sm:$0xf]
    %v110 = vld [vmem:[%s8 + $0x14] sm:$0xf]
    %v111 = vld [vmem:[%s8 + $0x18] sm:$0xf]
    %v112 = vld [vmem:[%s8 + $0x1c] sm:$0xf]
    %v113 = vld [vmem:[%s8 + $0x20] sm:$0xf]
    %v114 = vld [vmem:[%s8 + $0x24] sm:$0xf]
    %v115 = vld [vmem:[%s8 + $0x28] sm:$0xf]
    %v116 = vld [vmem:[%s8 + $0x2c] sm:$0xf]
    %v117 = vld [vmem:[%s8 + $0x30] sm:$0xf]
    %v118 = vld [vmem:[%s8 + $0x34] sm:$0xf]
    %v119 = vld [vmem:[%s8 + $0x38] sm:$0xf]
    %v120 = vld [vmem:[%s8 + $0x3c] sm:$0xf]
    %v121 = vld [vmem:[%s8 + $0x40] sm:$0xf]
    %v122 = vld [vmem:[%s8 + $0x44] sm:$0xf]
    %v123 = vld [vmem:[%s8 + $0x48] sm:$0xf]
    %v124 = vld [vmem:[%s8 + $0x4c] sm:$0xf]
    %v125 = vld [vmem:[%s8 + $0x50] sm:$0xf]
    %v126 = vld [vmem:[%s8 + $0x54] sm:$0xf]
    %v127 = vld [vmem:[%s8 + $0x58] sm:$0xf]
    %v128 = vld [vmem:[%s8 + $0x5c] sm:$0xf]
    %v129 = vld [vmem:[%s8 + $0x60] sm:$0xf]
    %v130 = vld [vmem:[%s8 + $0x64] sm:$0xf]
    %v131 = vld [vmem:[%s8 + $0x68] sm:$0xf]
    %v132 = vld [vmem:[%s8 + $0x6c] sm:$0xf]
    %v133 = vld [vmem:[%s8 + $0x70] sm:$0xf]
    %v134 = vld [vmem:[%s8 + $0x74] sm:$0xf]
    %v135 = vld [vmem:[%s8 + $0x78] sm:$0xf]
    %v136 = vld [vmem:[%s8 + $0x7c] sm:$0xf]
    %v137 = vld [vmem:[%s8 + $0x80] sm:$0xf]
    %v138 = vld [vmem:[%s8 + $0x84] sm:$0xf]
    %v139 = vld [vmem:[%s8 + $0x88] sm:$0xf]
    %v140 = vld [vmem:[%s8 + $0x8c] sm:$0xf]
    %v141 = vld [vmem:[%s8 + $0x90] sm:$0xf]
    %v142 = vld [vmem:[%s8 + $0x94] sm:$0xf]
    %v143 = vld [vmem:[%s8 + $0x98] sm:$0xf]
    %v144 = vld [vmem:[%s8 + $0x9c] sm:$0xf]
    %v145 = vld [vmem:[%s8 + $0xa0] sm:$0xf]
    %v146 = vld [vmem:[%s8 + $0xa4] sm:$0xf]
    %v147 = vld [vmem:[%s8 + $0xa8] sm:$0xf]
    %v148 = vld [vmem:[%s8 + $0xac] sm:$0xf]
    %v149 = vld [vmem:[%s8 + $0xb0] sm:$0xf]
    %v150 = vld [vmem:[%s8 + $0xb4] sm:$0xf]
    %v151 = vld [vmem:[%s8 + $0xb8] sm:$0xf]
    %v152 = vld [vmem:[%s8 + $0xbc] sm:$0xf]
    %vm153 = vcmask 523264
    %v154 = vsel %vm153, %v34, 0.0
    %155 = vadd.xlane.f32.xlu0 %v154
    %v156 = vpop.xlane.xlu0 %155
    %v157 = vsel %vm153, %v35, 0.0
    %158 = vadd.xlane.f32.xlu0 %v157
    %v159 = vpop.xlane.xlu0 %158
    %v160 = vsel %vm153, %v36, 0.0
    %161 = vadd.xlane.f32.xlu0 %v160
    %v162 = vpop.xlane.xlu0 %161
    %v163 = vsel %vm153, %v37, 0.0
    %164 = vadd.xlane.f32.xlu0 %v163
    %v165 = vpop.xlane.xlu0 %164
    %v166 = vrcp.pop 64.0
    %v167 = vmul.f32 64.0, %v166
    %v168 = vsub.f32 1.0, %v167
    %v169 = vmul.f32 %v166, %v168
    %v170 = vadd.f32 %v166, %v169
    %vm171 = vweird.f32 %v166
    %v172 = vsel %vm171, %v166, %v170
    %v173 = vmul.f32 %v156, %v172
    %v174 = vmul.f32 %v159, %v172
    %v175 = vmul.f32 %v162, %v172
    %v176 = vmul.f32 %v165, %v172
    %v177 = vsub.f32 %v34, %v173
    %v178 = vsub.f32 %v35, %v174
    %v179 = vsub.f32 %v36, %v175
    %v180 = vsub.f32 %v37, %v176
    %v181 = vmul.f32 %v177, %v177
    %v182 = vmul.f32 %v178, %v178
    %v183 = vmul.f32 %v179, %v179
    %v184 = vmul.f32 %v180, %v180
    %v185 = vsel %vm153, %v181, 0.0
    %186 = vadd.xlane.f32.xlu0 %v185
    %v187 = vpop.xlane.xlu0 %186
    %v188 = vsel %vm153, %v182, 0.0
    %189 = vadd.xlane.f32.xlu0 %v188
    %v190 = vpop.xlane.xlu0 %189
    %v191 = vsel %vm153, %v183, 0.0
    %192 = vadd.xlane.f32.xlu0 %v191
    %v193 = vpop.xlane.xlu0 %192
    %v194 = vsel %vm153, %v184, 0.0
    %195 = vadd.xlane.f32.xlu0 %v194
    %v196 = vpop.xlane.xlu0 %195
    %v197 = vmul.f32 %v187, %v172
    %v198 = vmul.f32 %v190, %v172
    %v199 = vmul.f32 %v193, %v172
    %v200 = vmul.f32 %v196, %v172
    %v201 = vadd.f32 %v197, 1e-06
    %v202 = vadd.f32 %v198, 1e-06
    %v203 = vadd.f32 %v199, 1e-06
    %v204 = vadd.f32 %v200, 1e-06
    %v205 = vrsqrt.pop %v201
    %v206 = vmul.f32 %v205, %v201
    %v207 = vmul.f32 %v206, %v205
    %v208 = vmul.f32 0.5, %v207
    %v209 = vsub.f32 1.5, %v208
    %v210 = vmul.f32 %v205, %v209
    %vm211 = vweird.f32 %v201
    %vm212 = vweird.f32 %v205
    %vm213 = vmor %vm211, %vm212
    %v214 = vsel %vm213, %v205, %v210
    %v215 = vrsqrt.pop %v202
    %v216 = vmul.f32 %v215, %v202
    %v217 = vmul.f32 %v216, %v215
    %v218 = vmul.f32 0.5, %v217
    %v219 = vsub.f32 1.5, %v218
    %v220 = vmul.f32 %v215, %v219
    %vm221 = vweird.f32 %v202
    %vm222 = vweird.f32 %v215
    %vm223 = vmor %vm221, %vm222
    %v224 = vsel %vm223, %v215, %v220
    %v225 = vrsqrt.pop %v203
    %v226 = vmul.f32 %v225, %v203
    %v227 = vmul.f32 %v226, %v225
    %v228 = vmul.f32 0.5, %v227
    %v229 = vsub.f32 1.5, %v228
    %v230 = vmul.f32 %v225, %v229
    %vm231 = vweird.f32 %v203
    %vm232 = vweird.f32 %v225
    %vm233 = vmor %vm231, %vm232
    %v234 = vsel %vm233, %v225, %v230
    %v235 = vrsqrt.pop %v204
    %v236 = vmul.f32 %v235, %v204
    %v237 = vmul.f32 %v236, %v235
    %v238 = vmul.f32 0.5, %v237
    %v239 = vsub.f32 1.5, %v238
    %v240 = vmul.f32 %v235, %v239
    %vm241 = vweird.f32 %v204
    %vm242 = vweird.f32 %v235
    %vm243 = vmor %vm241, %vm242
    %v244 = vsel %vm243, %v235, %v240
    %v245 = vmul.f32 %v177, %v214
    %v246 = vmul.f32 %v178, %v224
    %v247 = vmul.f32 %v179, %v234
    %v248 = vmul.f32 %v180, %v244
    %v249 = vperm.slane %v62, 0
    %v250 = vmul.f32 %v245, %v249
    %v251 = vmul.f32 %v246, %v249
    %v252 = vmul.f32 %v247, %v249
    %v253 = vmul.f32 %v248, %v249
    %v254 = vperm.slane %v62, 1
    %v255 = vadd.f32 %v250, %v254
    %v256 = vadd.f32 %v251, %v254
    %v257 = vadd.f32 %v252, %v254
    %v258 = vadd.f32 %v253, %v254
    %v259 = vpack.c.bf16 %v256, %v255
    %v260 = vpack.c.bf16 %v258, %v257
    %v277 = vunpack.c.l.b16 %v65
    %v278 = vunpack.c.h.b16 %v65
    %v279 = vunpack.c.l.b16 %v66
    %v280 = vunpack.c.l.b16 %v67
    %v281 = vunpack.c.h.b16 %v67
    %v282 = vunpack.c.l.b16 %v68
    %v283 = vunpack.c.l.b16 %v69
    %v284 = vunpack.c.h.b16 %v69
    %v285 = vunpack.c.l.b16 %v70
    %v286 = vunpack.c.l.b16 %v71
    %v287 = vunpack.c.h.b16 %v71
    %v288 = vunpack.c.l.b16 %v72
    %v289 = vunpack.c.l.b16 %v73
    %v290 = vunpack.c.h.b16 %v73
    %v291 = vunpack.c.l.b16 %v74
    %v292 = vunpack.c.l.b16 %v75
    %v293 = vunpack.c.h.b16 %v75
    %v294 = vunpack.c.l.b16 %v76
    %v295 = vunpack.c.l.b16 %v77
    %v296 = vunpack.c.h.b16 %v77
    %v297 = vunpack.c.l.b16 %v78
    %v298 = vunpack.c.l.b16 %v79
    %v299 = vunpack.c.h.b16 %v79
    %v300 = vunpack.c.l.b16 %v80
    %v301 = vpack.c.b16 %v280, %v277
    %v302 = vpack.c.b16 %v281, %v278
    %v303 = vpack.c.b16 %v282, %v279
    %v304 = vpack.c.b16 %v286, %v283
    %v305 = vpack.c.b16 %v287, %v284
    %v306 = vpack.c.b16 %v288, %v285
    %v307 = vpack.c.b16 %v292, %v289
    %v308 = vpack.c.b16 %v293, %v290
    %v309 = vpack.c.b16 %v294, %v291
    %v310 = vpack.c.b16 %v298, %v295
    %v311 = vpack.c.b16 %v299, %v296
    %v312 = vpack.c.b16 %v300, %v297
    %v326 = vsel %vm153, %v259, 0
    %v329 = vsel %vm153, %v260, 0
    %331 = vmatpush.bf16.msra.mxu0 0
    %332 = vmatpush.bf16.msra.mxu0 0
    %333 = vmatpush.bf16.msra.mxu0 0
    %334 = vmatpush.bf16.msra.mxu0 0
    %335 = vmatpush.bf16.msra.mxu0 %v310
    %336 = vmatpush.bf16.msra.mxu0 %v307
    %337 = vmatpush.bf16.msra.mxu0 %v304
    %338 = vmatpush.bf16.msra.mxu0 %v301
    %339 = vmatmul.bf16.gmra.mxu0 %v326
    %v340 = vpop.f32.mrf.mxu0
    %v341 = vadd.f32 0.0, %v340
    %v342 = vpop.f32.mrf.mxu0
    %v343 = vadd.f32 0.0, %v342
    %344 = vmatmul.bf16.gmra.mxu0 %v329
    %v345 = vpop.f32.mrf.mxu0
    %v346 = vadd.f32 0.0, %v345
    %v347 = vpop.f32.mrf.mxu0
    %v348 = vadd.f32 0.0, %v347
    %349 = vdwg.mxu0
    %350 = vmatpush.bf16.msra.mxu0 0
    %351 = vmatpush.bf16.msra.mxu0 0
    %352 = vmatpush.bf16.msra.mxu0 0
    %353 = vmatpush.bf16.msra.mxu0 0
    %354 = vmatpush.bf16.msra.mxu0 %v311
    %355 = vmatpush.bf16.msra.mxu0 %v308
    %356 = vmatpush.bf16.msra.mxu0 %v305
    %357 = vmatpush.bf16.msra.mxu0 %v302
    %358 = vmatmul.bf16.gmra.mxu0 %v326
    %v359 = vpop.f32.mrf.mxu0
    %v360 = vadd.f32 0.0, %v359
    %v361 = vpop.f32.mrf.mxu0
    %v362 = vadd.f32 0.0, %v361
    %363 = vmatmul.bf16.gmra.mxu0 %v329
    %v364 = vpop.f32.mrf.mxu0
    %v365 = vadd.f32 0.0, %v364
    %v366 = vpop.f32.mrf.mxu0
    %v367 = vadd.f32 0.0, %v366
    %368 = vdwg.mxu0
    %369 = vmatpush.bf16.msra.mxu0 0
    %370 = vmatpush.bf16.msra.mxu0 0
    %371 = vmatpush.bf16.msra.mxu0 0
    %372 = vmatpush.bf16.msra.mxu0 0
    %373 = vmatpush.bf16.msra.mxu0 %v312
    %374 = vmatpush.bf16.msra.mxu0 %v309
    %375 = vmatpush.bf16.msra.mxu0 %v306
    %376 = vmatpush.bf16.msra.mxu0 %v303
    %377 = vmatmul.bf16.gmra.mxu0 %v326
    %v378 = vpop.f32.mrf.mxu0
    %v379 = vadd.f32 0.0, %v378
    %v380 = vpop.f32.mrf.mxu0
    %v381 = vadd.f32 0.0, %v380
    %382 = vmatmul.bf16.gmra.mxu0 %v329
    %v383 = vpop.f32.mrf.mxu0
    %v384 = vadd.f32 0.0, %v383
    %v385 = vpop.f32.mrf.mxu0
    %v386 = vadd.f32 0.0, %v385
    %387 = vdwg.mxu0
    %v388 = vmul.f32 %v341, %v42
    %v389 = vmul.f32 %v343, %v43
    %v390 = vmul.f32 %v346, %v44
    %v391 = vmul.f32 %v348, %v45
    %396 = vrot.lane.b32.xlu0 %v46, 64
    %v397 = vpop.permute.xlu0 %396
    %398 = vrot.lane.b32.xlu0 %v47, 64
    %v399 = vpop.permute.xlu0 %398
    %400 = vrot.lane.b32.xlu0 %v48, 64
    %v401 = vpop.permute.xlu0 %400
    %402 = vrot.lane.b32.xlu0 %v49, 64
    %v403 = vpop.permute.xlu0 %402
    %v408 = vmul.f32 %v360, %v397
    %v409 = vmul.f32 %v362, %v399
    %v410 = vmul.f32 %v365, %v401
    %v411 = vmul.f32 %v367, %v403
    %416 = vrot.lane.b32.xlu0 %v408, 64
    %v417 = vpop.permute.xlu0 %416
    %418 = vrot.lane.b32.xlu0 %v409, 64
    %v419 = vpop.permute.xlu0 %418
    %420 = vrot.lane.b32.xlu0 %v410, 64
    %v421 = vpop.permute.xlu0 %420
    %422 = vrot.lane.b32.xlu0 %v411, 64
    %v423 = vpop.permute.xlu0 %422
    %v428 = vadd.f32 %v388, %v417
    %v429 = vadd.f32 %v389, %v419
    %v430 = vadd.f32 %v390, %v421
    %v431 = vadd.f32 %v391, %v423
    %436 = vrot.lane.b32.xlu0 %v42, 64
    %v437 = vpop.permute.xlu0 %436
    %438 = vrot.lane.b32.xlu0 %v43, 64
    %v439 = vpop.permute.xlu0 %438
    %440 = vrot.lane.b32.xlu0 %v44, 64
    %v441 = vpop.permute.xlu0 %440
    %442 = vrot.lane.b32.xlu0 %v45, 64
    %v443 = vpop.permute.xlu0 %442
    %v448 = vmul.f32 %v341, %v437
    %v449 = vmul.f32 %v343, %v439
    %v450 = vmul.f32 %v346, %v441
    %v451 = vmul.f32 %v348, %v443
    %v452 = vmul.f32 %v379, %v46
    %v453 = vmul.f32 %v381, %v47
    %v454 = vmul.f32 %v384, %v48
    %v455 = vmul.f32 %v386, %v49
    %460 = vrot.lane.b32.xlu0 %v452, 64
    %v461 = vpop.permute.xlu0 %460
    %462 = vrot.lane.b32.xlu0 %v453, 64
    %v463 = vpop.permute.xlu0 %462
    %464 = vrot.lane.b32.xlu0 %v454, 64
    %v465 = vpop.permute.xlu0 %464
    %466 = vrot.lane.b32.xlu0 %v455, 64
    %v467 = vpop.permute.xlu0 %466
    %v472 = vadd.f32 %v448, %v461
    %v473 = vadd.f32 %v449, %v463
    %v474 = vadd.f32 %v450, %v465
    %v475 = vadd.f32 %v451, %v467
    %v476 = vpack.c.bf16 %v429, %v428
    %v477 = vpack.c.bf16 %v431, %v430
    %v478 = vpack.c.bf16 %v473, %v472
    %v479 = vpack.c.bf16 %v475, %v474
    %482 = vrot.lane.b32.xlu0 %v478, 64
    %v483 = vpop.permute.xlu0 %482
    %484 = vrot.lane.b32.xlu0 %v479, 64
    %v485 = vpop.permute.xlu0 %484
    %vm486 = vcmask 261120
    %v488 = vsel %vm486, %v476, 0
    %v491 = vsel %vm486, %v477, 0
    %v494 = vsel %vm486, %v483, 0
    %v497 = vsel %vm486, %v485, 0
    %499 = vmatpush.bf16.xpose.msra.mxu0 0
    %500 = vmatpush.bf16.xpose.msra.mxu0 0
    %501 = vmatpush.bf16.xpose.msra.mxu0 0
    %502 = vmatpush.bf16.xpose.msra.mxu0 0
    %503 = vmatpush.bf16.xpose.msra.mxu0 0
    %504 = vmatpush.bf16.xpose.msra.mxu0 0
    %505 = vmatpush.bf16.xpose.msra.mxu0 %v497
    %506 = vmatpush.bf16.xpose.msra.mxu0 %v494
    %507 = vmatmul.bf16.gmra.mxu0 %v488
    %v508 = vpop.f32.mrf.mxu0
    %v509 = vadd.f32 %v58, %v508
    %v510 = vpop.f32.mrf.mxu0
    %v511 = vadd.f32 %v59, %v510
    %512 = vmatmul.bf16.gmra.mxu0 %v491
    %v513 = vpop.f32.mrf.mxu0
    %v514 = vadd.f32 %v60, %v513
    %v515 = vpop.f32.mrf.mxu0
    %v516 = vadd.f32 %v61, %v515
    %517 = vdwg.mxu0
    %v518 = vsel %vm486, %v509, -inf
    %519 = vmax.xlane.f32.xlu0 %v518
    %v520 = vpop.xlane.xlu0 %519
    %v521 = vsel %vm486, %v511, -inf
    %522 = vmax.xlane.f32.xlu0 %v521
    %v523 = vpop.xlane.xlu0 %522
    %v524 = vsel %vm486, %v514, -inf
    %525 = vmax.xlane.f32.xlu0 %v524
    %v526 = vpop.xlane.xlu0 %525
    %v527 = vsel %vm486, %v516, -inf
    %528 = vmax.xlane.f32.xlu0 %v527
    %v529 = vpop.xlane.xlu0 %528
    %v530 = vsub.f32 %v509, %v520
    %v531 = vsub.f32 %v511, %v523
    %v532 = vsub.f32 %v514, %v526
    %v533 = vsub.f32 %v516, %v529
    %v534 = vmul.f32 %v530, 1.442695
    %v535 = vpow.pop %v534
    %v536 = vmul.f32 %v531, 1.442695
    %v537 = vpow.pop %v536
    %v538 = vmul.f32 %v532, 1.442695
    %v539 = vpow.pop %v538
    %v540 = vmul.f32 %v533, 1.442695
    %v541 = vpow.pop %v540
    %v542 = vsel %vm486, %v535, 0.0
    %543 = vadd.xlane.f32.xlu0 %v542
    %v544 = vpop.xlane.xlu0 %543
    %v545 = vsel %vm486, %v537, 0.0
    %546 = vadd.xlane.f32.xlu0 %v545
    %v547 = vpop.xlane.xlu0 %546
    %v548 = vsel %vm486, %v539, 0.0
    %549 = vadd.xlane.f32.xlu0 %v548
    %v550 = vpop.xlane.xlu0 %549
    %v551 = vsel %vm486, %v541, 0.0
    %552 = vadd.xlane.f32.xlu0 %v551
    %v553 = vpop.xlane.xlu0 %552
    %v554 = vrcp.pop %v544
    %v555 = vrcp.pop %v547
    %v556 = vrcp.pop %v550
    %v557 = vrcp.pop %v553
    %v558 = vmul.f32 %v535, %v554
    %v559 = vmul.f32 %v537, %v555
    %v560 = vmul.f32 %v539, %v556
    %v561 = vmul.f32 %v541, %v557
    %v562 = vpack.c.bf16 %v559, %v558
    %v563 = vpack.c.bf16 %v561, %v560
    %v564 = vpack.c.bf16 %v362, %v360
    %v565 = vpack.c.bf16 %v367, %v365
    %v567 = vsel %vm486, %v562, 0
    %v570 = vsel %vm486, %v563, 0
    %572 = vmatpush.bf16.msra.mxu0 0
    %573 = vmatpush.bf16.msra.mxu0 0
    %574 = vmatpush.bf16.msra.mxu0 0
    %575 = vmatpush.bf16.msra.mxu0 0
    %576 = vmatpush.bf16.msra.mxu0 0
    %577 = vmatpush.bf16.msra.mxu0 0
    %578 = vmatpush.bf16.msra.mxu0 %v565
    %579 = vmatpush.bf16.msra.mxu0 %v564
    %580 = vmatmul.bf16.gmra.mxu0 %v567
    %v581 = vpop.f32.mrf.mxu0
    %v582 = vadd.f32 0.0, %v581
    %v583 = vpop.f32.mrf.mxu0
    %v584 = vadd.f32 0.0, %v583
    %585 = vmatmul.bf16.gmra.mxu0 %v570
    %v586 = vpop.f32.mrf.mxu0
    %v587 = vadd.f32 0.0, %v586
    %v588 = vpop.f32.mrf.mxu0
    %v589 = vadd.f32 0.0, %v588
    %590 = vdwg.mxu0
    %v591 = vpack.c.bf16 %v584, %v582
    %v592 = vpack.c.bf16 %v589, %v587
    %595 = vrot.lane.b32.xlu0 %v476, 96
    %v596 = vpop.permute.xlu0 %595
    %597 = vrot.lane.b32.xlu0 %v477, 96
    %v598 = vpop.permute.xlu0 %597
    %599 = vrot.lane.b32.xlu0 %v478, 32
    %v600 = vpop.permute.xlu0 %599
    %601 = vrot.lane.b32.xlu0 %v479, 32
    %v602 = vpop.permute.xlu0 %601
    %v604 = vsel %vm486, %v596, 0
    %v607 = vsel %vm486, %v598, 0
    %v610 = vsel %vm486, %v600, 0
    %v613 = vsel %vm486, %v602, 0
    %615 = vmatpush.bf16.xpose.msra.mxu0 0
    %616 = vmatpush.bf16.xpose.msra.mxu0 0
    %617 = vmatpush.bf16.xpose.msra.mxu0 0
    %618 = vmatpush.bf16.xpose.msra.mxu0 0
    %619 = vmatpush.bf16.xpose.msra.mxu0 0
    %620 = vmatpush.bf16.xpose.msra.mxu0 0
    %621 = vmatpush.bf16.xpose.msra.mxu0 %v613
    %622 = vmatpush.bf16.xpose.msra.mxu0 %v610
    %623 = vmatmul.bf16.gmra.mxu0 %v604
    %v624 = vpop.f32.mrf.mxu0
    %v625 = vadd.f32 %v58, %v624
    %v626 = vpop.f32.mrf.mxu0
    %v627 = vadd.f32 %v59, %v626
    %628 = vmatmul.bf16.gmra.mxu0 %v607
    %v629 = vpop.f32.mrf.mxu0
    %v630 = vadd.f32 %v60, %v629
    %v631 = vpop.f32.mrf.mxu0
    %v632 = vadd.f32 %v61, %v631
    %633 = vdwg.mxu0
    %v634 = vsel %vm486, %v625, -inf
    %635 = vmax.xlane.f32.xlu0 %v634
    %v636 = vpop.xlane.xlu0 %635
    %v637 = vsel %vm486, %v627, -inf
    %638 = vmax.xlane.f32.xlu0 %v637
    %v639 = vpop.xlane.xlu0 %638
    %v640 = vsel %vm486, %v630, -inf
    %641 = vmax.xlane.f32.xlu0 %v640
    %v642 = vpop.xlane.xlu0 %641
    %v643 = vsel %vm486, %v632, -inf
    %644 = vmax.xlane.f32.xlu0 %v643
    %v645 = vpop.xlane.xlu0 %644
    %v646 = vsub.f32 %v625, %v636
    %v647 = vsub.f32 %v627, %v639
    %v648 = vsub.f32 %v630, %v642
    %v649 = vsub.f32 %v632, %v645
    %v650 = vmul.f32 %v646, 1.442695
    %v651 = vpow.pop %v650
    %v652 = vmul.f32 %v647, 1.442695
    %v653 = vpow.pop %v652
    %v654 = vmul.f32 %v648, 1.442695
    %v655 = vpow.pop %v654
    %v656 = vmul.f32 %v649, 1.442695
    %v657 = vpow.pop %v656
    %v658 = vsel %vm486, %v651, 0.0
    %659 = vadd.xlane.f32.xlu0 %v658
    %v660 = vpop.xlane.xlu0 %659
    %v661 = vsel %vm486, %v653, 0.0
    %662 = vadd.xlane.f32.xlu0 %v661
    %v663 = vpop.xlane.xlu0 %662
    %v664 = vsel %vm486, %v655, 0.0
    %665 = vadd.xlane.f32.xlu0 %v664
    %v666 = vpop.xlane.xlu0 %665
    %v667 = vsel %vm486, %v657, 0.0
    %668 = vadd.xlane.f32.xlu0 %v667
    %v669 = vpop.xlane.xlu0 %668
    %v670 = vrcp.pop %v660
    %v671 = vrcp.pop %v663
    %v672 = vrcp.pop %v666
    %v673 = vrcp.pop %v669
    %v674 = vmul.f32 %v651, %v670
    %v675 = vmul.f32 %v653, %v671
    %v676 = vmul.f32 %v655, %v672
    %v677 = vmul.f32 %v657, %v673
    %v678 = vpack.c.bf16 %v675, %v674
    %v679 = vpack.c.bf16 %v677, %v676
    %682 = vrot.lane.b32.xlu0 %v564, 96
    %v683 = vpop.permute.xlu0 %682
    %684 = vrot.lane.b32.xlu0 %v565, 96
    %v685 = vpop.permute.xlu0 %684
    %v689 = vsel %vm486, %v678, 0
    %v692 = vsel %vm486, %v679, 0
    %694 = vmatpush.bf16.msra.mxu0 0
    %695 = vmatpush.bf16.msra.mxu0 0
    %696 = vmatpush.bf16.msra.mxu0 0
    %697 = vmatpush.bf16.msra.mxu0 0
    %698 = vmatpush.bf16.msra.mxu0 0
    %699 = vmatpush.bf16.msra.mxu0 0
    %700 = vmatpush.bf16.msra.mxu0 %v685
    %701 = vmatpush.bf16.msra.mxu0 %v683
    %702 = vmatmul.bf16.gmra.mxu0 %v689
    %v703 = vpop.f32.mrf.mxu0
    %v704 = vadd.f32 0.0, %v703
    %v705 = vpop.f32.mrf.mxu0
    %v706 = vadd.f32 0.0, %v705
    %707 = vmatmul.bf16.gmra.mxu0 %v692
    %v708 = vpop.f32.mrf.mxu0
    %v709 = vadd.f32 0.0, %v708
    %v710 = vpop.f32.mrf.mxu0
    %v711 = vadd.f32 0.0, %v710
    %712 = vdwg.mxu0
    %v713 = vpack.c.bf16 %v706, %v704
    %v714 = vpack.c.bf16 %v711, %v709
    %v719 = vunpack.c.l.b16 %v109
    %v720 = vunpack.c.l.b16 %v110
    %v721 = vunpack.c.l.b16 %v111
    %v722 = vunpack.c.l.b16 %v112
    %v723 = vpack.c.b16 %v720, %v719
    %v724 = vpack.c.b16 %v722, %v721
    %v728 = vsel %vm486, %v713, 0
    %v731 = vsel %vm486, %v714, 0
    %733 = vmatpush.bf16.msra.mxu0 0
    %734 = vmatpush.bf16.msra.mxu0 0
    %735 = vmatpush.bf16.msra.mxu0 0
    %736 = vmatpush.bf16.msra.mxu0 0
    %737 = vmatpush.bf16.msra.mxu0 0
    %738 = vmatpush.bf16.msra.mxu0 0
    %739 = vmatpush.bf16.msra.mxu0 %v724
    %740 = vmatpush.bf16.msra.mxu0 %v723
    %741 = vmatmul.bf16.gmra.mxu0 %v728
    %v742 = vpop.f32.mrf.mxu0
    %v743 = vadd.f32 0.0, %v742
    %v744 = vpop.f32.mrf.mxu0
    %v745 = vadd.f32 0.0, %v744
    %746 = vmatmul.bf16.gmra.mxu0 %v731
    %v747 = vpop.f32.mrf.mxu0
    %v748 = vadd.f32 0.0, %v747
    %v749 = vpop.f32.mrf.mxu0
    %v750 = vadd.f32 0.0, %v749
    %751 = vdwg.mxu0
    %v756 = vunpack.c.l.b16 %v105
    %v757 = vunpack.c.l.b16 %v106
    %v758 = vunpack.c.l.b16 %v107
    %v759 = vunpack.c.l.b16 %v108
    %v760 = vpack.c.b16 %v757, %v756
    %v761 = vpack.c.b16 %v759, %v758
    %v765 = vsel %vm486, %v591, 0
    %v768 = vsel %vm486, %v592, 0
    %770 = vmatpush.bf16.msra.mxu0 0
    %771 = vmatpush.bf16.msra.mxu0 0
    %772 = vmatpush.bf16.msra.mxu0 0
    %773 = vmatpush.bf16.msra.mxu0 0
    %774 = vmatpush.bf16.msra.mxu0 0
    %775 = vmatpush.bf16.msra.mxu0 0
    %776 = vmatpush.bf16.msra.mxu0 %v761
    %777 = vmatpush.bf16.msra.mxu0 %v760
    %778 = vmatmul.bf16.gmra.mxu0 %v765
    %v779 = vpop.f32.mrf.mxu0
    %v780 = vadd.f32 %v743, %v779
    %v781 = vpop.f32.mrf.mxu0
    %v782 = vadd.f32 %v745, %v781
    %783 = vmatmul.bf16.gmra.mxu0 %v768
    %v784 = vpop.f32.mrf.mxu0
    %v785 = vadd.f32 %v748, %v784
    %v786 = vpop.f32.mrf.mxu0
    %v787 = vadd.f32 %v750, %v786
    %788 = vdwg.mxu0
    %v789 = vperm.slane %v63, 0
    %v790 = vadd.f32 %v780, %v789
    %v791 = vadd.f32 %v782, %v789
    %v792 = vadd.f32 %v785, %v789
    %v793 = vadd.f32 %v787, %v789
    %v794 = vadd.f32 %v34, %v790
    %v795 = vadd.f32 %v35, %v791
    %v796 = vadd.f32 %v36, %v792
    %v797 = vadd.f32 %v37, %v793
    %v798 = vsel %vm153, %v38, 0.0
    %799 = vadd.xlane.f32.xlu0 %v798
    %v800 = vpop.xlane.xlu0 %799
    %v801 = vsel %vm153, %v39, 0.0
    %802 = vadd.xlane.f32.xlu0 %v801
    %v803 = vpop.xlane.xlu0 %802
    %v804 = vsel %vm153, %v40, 0.0
    %805 = vadd.xlane.f32.xlu0 %v804
    %v806 = vpop.xlane.xlu0 %805
    %v807 = vsel %vm153, %v41, 0.0
    %808 = vadd.xlane.f32.xlu0 %v807
    %v809 = vpop.xlane.xlu0 %808
    %v810 = vmul.f32 %v800, %v172
    %v811 = vmul.f32 %v803, %v172
    %v812 = vmul.f32 %v806, %v172
    %v813 = vmul.f32 %v809, %v172
    %v814 = vsub.f32 %v38, %v810
    %v815 = vsub.f32 %v39, %v811
    %v816 = vsub.f32 %v40, %v812
    %v817 = vsub.f32 %v41, %v813
    %v818 = vmul.f32 %v814, %v814
    %v819 = vmul.f32 %v815, %v815
    %v820 = vmul.f32 %v816, %v816
    %v821 = vmul.f32 %v817, %v817
    %v822 = vsel %vm153, %v818, 0.0
    %823 = vadd.xlane.f32.xlu0 %v822
    %v824 = vpop.xlane.xlu0 %823
    %v825 = vsel %vm153, %v819, 0.0
    %826 = vadd.xlane.f32.xlu0 %v825
    %v827 = vpop.xlane.xlu0 %826
    %v828 = vsel %vm153, %v820, 0.0
    %829 = vadd.xlane.f32.xlu0 %v828
    %v830 = vpop.xlane.xlu0 %829
    %v831 = vsel %vm153, %v821, 0.0
    %832 = vadd.xlane.f32.xlu0 %v831
    %v833 = vpop.xlane.xlu0 %832
    %v834 = vmul.f32 %v824, %v172
    %v835 = vmul.f32 %v827, %v172
    %v836 = vmul.f32 %v830, %v172
    %v837 = vmul.f32 %v833, %v172
    %v838 = vadd.f32 %v834, 1e-06
    %v839 = vadd.f32 %v835, 1e-06
    %v840 = vadd.f32 %v836, 1e-06
    %v841 = vadd.f32 %v837, 1e-06
    %v842 = vrsqrt.pop %v838
    %v843 = vmul.f32 %v842, %v838
    %v844 = vmul.f32 %v843, %v842
    %v845 = vmul.f32 0.5, %v844
    %v846 = vsub.f32 1.5, %v845
    %v847 = vmul.f32 %v842, %v846
    %vm848 = vweird.f32 %v838
    %vm849 = vweird.f32 %v842
    %vm850 = vmor %vm848, %vm849
    %v851 = vsel %vm850, %v842, %v847
    %v852 = vrsqrt.pop %v839
    %v853 = vmul.f32 %v852, %v839
    %v854 = vmul.f32 %v853, %v852
    %v855 = vmul.f32 0.5, %v854
    %v856 = vsub.f32 1.5, %v855
    %v857 = vmul.f32 %v852, %v856
    %vm858 = vweird.f32 %v839
    %vm859 = vweird.f32 %v852
    %vm860 = vmor %vm858, %vm859
    %v861 = vsel %vm860, %v852, %v857
    %v862 = vrsqrt.pop %v840
    %v863 = vmul.f32 %v862, %v840
    %v864 = vmul.f32 %v863, %v862
    %v865 = vmul.f32 0.5, %v864
    %v866 = vsub.f32 1.5, %v865
    %v867 = vmul.f32 %v862, %v866
    %vm868 = vweird.f32 %v840
    %vm869 = vweird.f32 %v862
    %vm870 = vmor %vm868, %vm869
    %v871 = vsel %vm870, %v862, %v867
    %v872 = vrsqrt.pop %v841
    %v873 = vmul.f32 %v872, %v841
    %v874 = vmul.f32 %v873, %v872
    %v875 = vmul.f32 0.5, %v874
    %v876 = vsub.f32 1.5, %v875
    %v877 = vmul.f32 %v872, %v876
    %vm878 = vweird.f32 %v841
    %vm879 = vweird.f32 %v872
    %vm880 = vmor %vm878, %vm879
    %v881 = vsel %vm880, %v872, %v877
    %v882 = vmul.f32 %v814, %v851
    %v883 = vmul.f32 %v815, %v861
    %v884 = vmul.f32 %v816, %v871
    %v885 = vmul.f32 %v817, %v881
    %v886 = vperm.slane %v62, 2
    %v887 = vmul.f32 %v882, %v886
    %v888 = vmul.f32 %v883, %v886
    %v889 = vmul.f32 %v884, %v886
    %v890 = vmul.f32 %v885, %v886
    %v891 = vperm.slane %v62, 3
    %v892 = vadd.f32 %v887, %v891
    %v893 = vadd.f32 %v888, %v891
    %v894 = vadd.f32 %v889, %v891
    %v895 = vadd.f32 %v890, %v891
    %v896 = vsel %vm153, %v794, 0.0
    %897 = vadd.xlane.f32.xlu0 %v896
    %v898 = vpop.xlane.xlu0 %897
    %v899 = vsel %vm153, %v795, 0.0
    %900 = vadd.xlane.f32.xlu0 %v899
    %v901 = vpop.xlane.xlu0 %900
    %v902 = vsel %vm153, %v796, 0.0
    %903 = vadd.xlane.f32.xlu0 %v902
    %v904 = vpop.xlane.xlu0 %903
    %v905 = vsel %vm153, %v797, 0.0
    %906 = vadd.xlane.f32.xlu0 %v905
    %v907 = vpop.xlane.xlu0 %906
    %v908 = vmul.f32 %v898, %v172
    %v909 = vmul.f32 %v901, %v172
    %v910 = vmul.f32 %v904, %v172
    %v911 = vmul.f32 %v907, %v172
    %v912 = vsub.f32 %v794, %v908
    %v913 = vsub.f32 %v795, %v909
    %v914 = vsub.f32 %v796, %v910
    %v915 = vsub.f32 %v797, %v911
    %v916 = vmul.f32 %v912, %v912
    %v917 = vmul.f32 %v913, %v913
    %v918 = vmul.f32 %v914, %v914
    %v919 = vmul.f32 %v915, %v915
    %v920 = vsel %vm153, %v916, 0.0
    %921 = vadd.xlane.f32.xlu0 %v920
    %v922 = vpop.xlane.xlu0 %921
    %v923 = vsel %vm153, %v917, 0.0
    %924 = vadd.xlane.f32.xlu0 %v923
    %v925 = vpop.xlane.xlu0 %924
    %v926 = vsel %vm153, %v918, 0.0
    %927 = vadd.xlane.f32.xlu0 %v926
    %v928 = vpop.xlane.xlu0 %927
    %v929 = vsel %vm153, %v919, 0.0
    %930 = vadd.xlane.f32.xlu0 %v929
    %v931 = vpop.xlane.xlu0 %930
    %v932 = vmul.f32 %v922, %v172
    %v933 = vmul.f32 %v925, %v172
    %v934 = vmul.f32 %v928, %v172
    %v935 = vmul.f32 %v931, %v172
    %v936 = vadd.f32 %v932, 1e-06
    %v937 = vadd.f32 %v933, 1e-06
    %v938 = vadd.f32 %v934, 1e-06
    %v939 = vadd.f32 %v935, 1e-06
    %v940 = vrsqrt.pop %v936
    %v941 = vmul.f32 %v940, %v936
    %v942 = vmul.f32 %v941, %v940
    %v943 = vmul.f32 0.5, %v942
    %v944 = vsub.f32 1.5, %v943
    %v945 = vmul.f32 %v940, %v944
    %vm946 = vweird.f32 %v936
    %vm947 = vweird.f32 %v940
    %vm948 = vmor %vm946, %vm947
    %v949 = vsel %vm948, %v940, %v945
    %v950 = vrsqrt.pop %v937
    %v951 = vmul.f32 %v950, %v937
    %v952 = vmul.f32 %v951, %v950
    %v953 = vmul.f32 0.5, %v952
    %v954 = vsub.f32 1.5, %v953
    %v955 = vmul.f32 %v950, %v954
    %vm956 = vweird.f32 %v937
    %vm957 = vweird.f32 %v950
    %vm958 = vmor %vm956, %vm957
    %v959 = vsel %vm958, %v950, %v955
    %v960 = vrsqrt.pop %v938
    %v961 = vmul.f32 %v960, %v938
    %v962 = vmul.f32 %v961, %v960
    %v963 = vmul.f32 0.5, %v962
    %v964 = vsub.f32 1.5, %v963
    %v965 = vmul.f32 %v960, %v964
    %vm966 = vweird.f32 %v938
    %vm967 = vweird.f32 %v960
    %vm968 = vmor %vm966, %vm967
    %v969 = vsel %vm968, %v960, %v965
    %v970 = vrsqrt.pop %v939
    %v971 = vmul.f32 %v970, %v939
    %v972 = vmul.f32 %v971, %v970
    %v973 = vmul.f32 0.5, %v972
    %v974 = vsub.f32 1.5, %v973
    %v975 = vmul.f32 %v970, %v974
    %vm976 = vweird.f32 %v939
    %vm977 = vweird.f32 %v970
    %vm978 = vmor %vm976, %vm977
    %v979 = vsel %vm978, %v970, %v975
    %v980 = vmul.f32 %v912, %v949
    %v981 = vmul.f32 %v913, %v959
    %v982 = vmul.f32 %v914, %v969
    %v983 = vmul.f32 %v915, %v979
    %v984 = vperm.slane %v62, 4
    %v985 = vmul.f32 %v980, %v984
    %v986 = vmul.f32 %v981, %v984
    %v987 = vmul.f32 %v982, %v984
    %v988 = vmul.f32 %v983, %v984
    %v989 = vperm.slane %v62, 5
    %v990 = vadd.f32 %v985, %v989
    %v991 = vadd.f32 %v986, %v989
    %v992 = vadd.f32 %v987, %v989
    %v993 = vadd.f32 %v988, %v989
    %v994 = vpack.c.bf16 %v991, %v990
    %v995 = vpack.c.bf16 %v993, %v992
    %v1004 = vunpack.c.l.b16 %v81
    %v1005 = vunpack.c.l.b16 %v82
    %v1006 = vunpack.c.l.b16 %v83
    %v1007 = vunpack.c.l.b16 %v84
    %v1008 = vunpack.c.l.b16 %v85
    %v1009 = vunpack.c.l.b16 %v86
    %v1010 = vunpack.c.l.b16 %v87
    %v1011 = vunpack.c.l.b16 %v88
    %v1012 = vpack.c.b16 %v1005, %v1004
    %v1013 = vpack.c.b16 %v1007, %v1006
    %v1014 = vpack.c.b16 %v1009, %v1008
    %v1015 = vpack.c.b16 %v1011, %v1010
    %v1021 = vsel %vm153, %v994, 0
    %v1024 = vsel %vm153, %v995, 0
    %1026 = vmatpush.bf16.msra.mxu0 0
    %1027 = vmatpush.bf16.msra.mxu0 0
    %1028 = vmatpush.bf16.msra.mxu0 0
    %1029 = vmatpush.bf16.msra.mxu0 0
    %1030 = vmatpush.bf16.msra.mxu0 %v1015
    %1031 = vmatpush.bf16.msra.mxu0 %v1014
    %1032 = vmatpush.bf16.msra.mxu0 %v1013
    %1033 = vmatpush.bf16.msra.mxu0 %v1012
    %1034 = vmatmul.bf16.gmra.mxu0 %v1021
    %v1035 = vpop.f32.mrf.mxu0
    %v1036 = vadd.f32 0.0, %v1035
    %v1037 = vpop.f32.mrf.mxu0
    %v1038 = vadd.f32 0.0, %v1037
    %1039 = vmatmul.bf16.gmra.mxu0 %v1024
    %v1040 = vpop.f32.mrf.mxu0
    %v1041 = vadd.f32 0.0, %v1040
    %v1042 = vpop.f32.mrf.mxu0
    %v1043 = vadd.f32 0.0, %v1042
    %1044 = vdwg.mxu0
    %v1045 = vmul.f32 %v1036, %v42
    %v1046 = vmul.f32 %v1038, %v43
    %v1047 = vmul.f32 %v1041, %v44
    %v1048 = vmul.f32 %v1043, %v45
    %v1049 = vmul.f32 %v1036, %v397
    %v1050 = vmul.f32 %v1038, %v399
    %v1051 = vmul.f32 %v1041, %v401
    %v1052 = vmul.f32 %v1043, %v403
    %1057 = vrot.lane.b32.xlu0 %v1049, 64
    %v1058 = vpop.permute.xlu0 %1057
    %1059 = vrot.lane.b32.xlu0 %v1050, 64
    %v1060 = vpop.permute.xlu0 %1059
    %1061 = vrot.lane.b32.xlu0 %v1051, 64
    %v1062 = vpop.permute.xlu0 %1061
    %1063 = vrot.lane.b32.xlu0 %v1052, 64
    %v1064 = vpop.permute.xlu0 %1063
    %v1069 = vadd.f32 %v1045, %v1058
    %v1070 = vadd.f32 %v1046, %v1060
    %v1071 = vadd.f32 %v1047, %v1062
    %v1072 = vadd.f32 %v1048, %v1064
    %v1073 = vpack.c.bf16 %v893, %v892
    %v1074 = vpack.c.bf16 %v895, %v894
    %v1083 = vunpack.c.l.b16 %v89
    %v1084 = vunpack.c.h.b16 %v89
    %v1085 = vunpack.c.l.b16 %v90
    %v1086 = vunpack.c.h.b16 %v90
    %v1087 = vunpack.c.l.b16 %v91
    %v1088 = vunpack.c.h.b16 %v91
    %v1089 = vunpack.c.l.b16 %v92
    %v1090 = vunpack.c.h.b16 %v92
    %v1091 = vunpack.c.l.b16 %v93
    %v1092 = vunpack.c.h.b16 %v93
    %v1093 = vunpack.c.l.b16 %v94
    %v1094 = vunpack.c.h.b16 %v94
    %v1095 = vunpack.c.l.b16 %v95
    %v1096 = vunpack.c.h.b16 %v95
    %v1097 = vunpack.c.l.b16 %v96
    %v1098 = vunpack.c.h.b16 %v96
    %v1099 = vpack.c.b16 %v1085, %v1083
    %v1100 = vpack.c.b16 %v1086, %v1084
    %v1101 = vpack.c.b16 %v1089, %v1087
    %v1102 = vpack.c.b16 %v1090, %v1088
    %v1103 = vpack.c.b16 %v1093, %v1091
    %v1104 = vpack.c.b16 %v1094, %v1092
    %v1105 = vpack.c.b16 %v1097, %v1095
    %v1106 = vpack.c.b16 %v1098, %v1096
    %v1116 = vsel %vm153, %v1073, 0
    %v1119 = vsel %vm153, %v1074, 0
    %1121 = vmatpush.bf16.msra.mxu0 0
    %1122 = vmatpush.bf16.msra.mxu0 0
    %1123 = vmatpush.bf16.msra.mxu0 0
    %1124 = vmatpush.bf16.msra.mxu0 0
    %1125 = vmatpush.bf16.msra.mxu0 %v1105
    %1126 = vmatpush.bf16.msra.mxu0 %v1103
    %1127 = vmatpush.bf16.msra.mxu0 %v1101
    %1128 = vmatpush.bf16.msra.mxu0 %v1099
    %1129 = vmatmul.bf16.gmra.mxu0 %v1116
    %v1130 = vpop.f32.mrf.mxu0
    %v1131 = vadd.f32 0.0, %v1130
    %v1132 = vpop.f32.mrf.mxu0
    %v1133 = vadd.f32 0.0, %v1132
    %1134 = vmatmul.bf16.gmra.mxu0 %v1119
    %v1135 = vpop.f32.mrf.mxu0
    %v1136 = vadd.f32 0.0, %v1135
    %v1137 = vpop.f32.mrf.mxu0
    %v1138 = vadd.f32 0.0, %v1137
    %1139 = vdwg.mxu0
    %1140 = vmatpush.bf16.msra.mxu0 0
    %1141 = vmatpush.bf16.msra.mxu0 0
    %1142 = vmatpush.bf16.msra.mxu0 0
    %1143 = vmatpush.bf16.msra.mxu0 0
    %1144 = vmatpush.bf16.msra.mxu0 %v1106
    %1145 = vmatpush.bf16.msra.mxu0 %v1104
    %1146 = vmatpush.bf16.msra.mxu0 %v1102
    %1147 = vmatpush.bf16.msra.mxu0 %v1100
    %1148 = vmatmul.bf16.gmra.mxu0 %v1116
    %v1149 = vpop.f32.mrf.mxu0
    %v1150 = vadd.f32 0.0, %v1149
    %v1151 = vpop.f32.mrf.mxu0
    %v1152 = vadd.f32 0.0, %v1151
    %1153 = vmatmul.bf16.gmra.mxu0 %v1119
    %v1154 = vpop.f32.mrf.mxu0
    %v1155 = vadd.f32 0.0, %v1154
    %v1156 = vpop.f32.mrf.mxu0
    %v1157 = vadd.f32 0.0, %v1156
    %1158 = vdwg.mxu0
    %v1159 = vmul.f32 %v1131, %v50
    %v1160 = vmul.f32 %v1133, %v51
    %v1161 = vmul.f32 %v1136, %v52
    %v1162 = vmul.f32 %v1138, %v53
    %v1163 = vmul.f32 %v1150, %v54
    %v1164 = vmul.f32 %v1152, %v55
    %v1165 = vmul.f32 %v1155, %v56
    %v1166 = vmul.f32 %v1157, %v57
    %v1167 = vadd.f32 %v1159, %v1163
    %v1168 = vadd.f32 %v1160, %v1164
    %v1169 = vadd.f32 %v1161, %v1165
    %v1170 = vadd.f32 %v1162, %v1166
    %v1171 = vpack.c.bf16 %v1070, %v1069
    %v1172 = vpack.c.bf16 %v1072, %v1071
    %v1173 = vpack.c.bf16 %v1168, %v1167
    %v1174 = vpack.c.bf16 %v1170, %v1169
    %v1176 = vsel %vm486, %v1171, 0
    %v1179 = vsel %vm486, %v1172, 0
    %v1182 = vsel %vm486, %v1173, 0
    %v1185 = vsel %vm486, %v1174, 0
    %1187 = vmatpush.bf16.xpose.msra.mxu0 0
    %1188 = vmatpush.bf16.xpose.msra.mxu0 0
    %1189 = vmatpush.bf16.xpose.msra.mxu0 0
    %1190 = vmatpush.bf16.xpose.msra.mxu0 0
    %1191 = vmatpush.bf16.xpose.msra.mxu0 0
    %1192 = vmatpush.bf16.xpose.msra.mxu0 0
    %1193 = vmatpush.bf16.xpose.msra.mxu0 %v1185
    %1194 = vmatpush.bf16.xpose.msra.mxu0 %v1182
    %1195 = vmatmul.bf16.gmra.mxu0 %v1176
    %v1196 = vpop.f32.mrf.mxu0
    %v1197 = vadd.f32 %v58, %v1196
    %v1198 = vpop.f32.mrf.mxu0
    %v1199 = vadd.f32 %v59, %v1198
    %1200 = vmatmul.bf16.gmra.mxu0 %v1179
    %v1201 = vpop.f32.mrf.mxu0
    %v1202 = vadd.f32 %v60, %v1201
    %v1203 = vpop.f32.mrf.mxu0
    %v1204 = vadd.f32 %v61, %v1203
    %1205 = vdwg.mxu0
    %v1206 = vsel %vm486, %v1197, -inf
    %1207 = vmax.xlane.f32.xlu0 %v1206
    %v1208 = vpop.xlane.xlu0 %1207
    %v1209 = vsel %vm486, %v1199, -inf
    %1210 = vmax.xlane.f32.xlu0 %v1209
    %v1211 = vpop.xlane.xlu0 %1210
    %v1212 = vsel %vm486, %v1202, -inf
    %1213 = vmax.xlane.f32.xlu0 %v1212
    %v1214 = vpop.xlane.xlu0 %1213
    %v1215 = vsel %vm486, %v1204, -inf
    %1216 = vmax.xlane.f32.xlu0 %v1215
    %v1217 = vpop.xlane.xlu0 %1216
    %v1218 = vsub.f32 %v1197, %v1208
    %v1219 = vsub.f32 %v1199, %v1211
    %v1220 = vsub.f32 %v1202, %v1214
    %v1221 = vsub.f32 %v1204, %v1217
    %v1222 = vmul.f32 %v1218, 1.442695
    %v1223 = vpow.pop %v1222
    %v1224 = vmul.f32 %v1219, 1.442695
    %v1225 = vpow.pop %v1224
    %v1226 = vmul.f32 %v1220, 1.442695
    %v1227 = vpow.pop %v1226
    %v1228 = vmul.f32 %v1221, 1.442695
    %v1229 = vpow.pop %v1228
    %v1230 = vsel %vm486, %v1223, 0.0
    %1231 = vadd.xlane.f32.xlu0 %v1230
    %v1232 = vpop.xlane.xlu0 %1231
    %v1233 = vsel %vm486, %v1225, 0.0
    %1234 = vadd.xlane.f32.xlu0 %v1233
    %v1235 = vpop.xlane.xlu0 %1234
    %v1236 = vsel %vm486, %v1227, 0.0
    %1237 = vadd.xlane.f32.xlu0 %v1236
    %v1238 = vpop.xlane.xlu0 %1237
    %v1239 = vsel %vm486, %v1229, 0.0
    %1240 = vadd.xlane.f32.xlu0 %v1239
    %v1241 = vpop.xlane.xlu0 %1240
    %v1242 = vrcp.pop %v1232
    %v1243 = vrcp.pop %v1235
    %v1244 = vrcp.pop %v1238
    %v1245 = vrcp.pop %v1241
    %v1246 = vmul.f32 %v1223, %v1242
    %v1247 = vmul.f32 %v1225, %v1243
    %v1248 = vmul.f32 %v1227, %v1244
    %v1249 = vmul.f32 %v1229, %v1245
    %v1250 = vpack.c.bf16 %v1247, %v1246
    %v1251 = vpack.c.bf16 %v1249, %v1248
    %v1252 = vpack.c.bf16 %v1133, %v1131
    %v1253 = vpack.c.bf16 %v1138, %v1136
    %1256 = vrot.lane.b32.xlu0 %v1252, 64
    %v1257 = vpop.permute.xlu0 %1256
    %1258 = vrot.lane.b32.xlu0 %v1253, 64
    %v1259 = vpop.permute.xlu0 %1258
    %v1263 = vsel %vm486, %v1250, 0
    %v1266 = vsel %vm486, %v1251, 0
    %1268 = vmatpush.bf16.msra.mxu0 0
    %1269 = vmatpush.bf16.msra.mxu0 0
    %1270 = vmatpush.bf16.msra.mxu0 0
    %1271 = vmatpush.bf16.msra.mxu0 0
    %1272 = vmatpush.bf16.msra.mxu0 0
    %1273 = vmatpush.bf16.msra.mxu0 0
    %1274 = vmatpush.bf16.msra.mxu0 %v1259
    %1275 = vmatpush.bf16.msra.mxu0 %v1257
    %1276 = vmatmul.bf16.gmra.mxu0 %v1263
    %v1277 = vpop.f32.mrf.mxu0
    %v1278 = vadd.f32 0.0, %v1277
    %v1279 = vpop.f32.mrf.mxu0
    %v1280 = vadd.f32 0.0, %v1279
    %1281 = vmatmul.bf16.gmra.mxu0 %v1266
    %v1282 = vpop.f32.mrf.mxu0
    %v1283 = vadd.f32 0.0, %v1282
    %v1284 = vpop.f32.mrf.mxu0
    %v1285 = vadd.f32 0.0, %v1284
    %1286 = vdwg.mxu0
    %v1287 = vpack.c.bf16 %v1280, %v1278
    %v1288 = vpack.c.bf16 %v1285, %v1283
    %1291 = vrot.lane.b32.xlu0 %v1171, 96
    %v1292 = vpop.permute.xlu0 %1291
    %1293 = vrot.lane.b32.xlu0 %v1172, 96
    %v1294 = vpop.permute.xlu0 %1293
    %1297 = vrot.lane.b32.xlu0 %v1173, 96
    %v1298 = vpop.permute.xlu0 %1297
    %1299 = vrot.lane.b32.xlu0 %v1174, 96
    %v1300 = vpop.permute.xlu0 %1299
    %v1302 = vsel %vm486, %v1292, 0
    %v1305 = vsel %vm486, %v1294, 0
    %v1308 = vsel %vm486, %v1298, 0
    %v1311 = vsel %vm486, %v1300, 0
    %1313 = vmatpush.bf16.xpose.msra.mxu0 0
    %1314 = vmatpush.bf16.xpose.msra.mxu0 0
    %1315 = vmatpush.bf16.xpose.msra.mxu0 0
    %1316 = vmatpush.bf16.xpose.msra.mxu0 0
    %1317 = vmatpush.bf16.xpose.msra.mxu0 0
    %1318 = vmatpush.bf16.xpose.msra.mxu0 0
    %1319 = vmatpush.bf16.xpose.msra.mxu0 %v1311
    %1320 = vmatpush.bf16.xpose.msra.mxu0 %v1308
    %1321 = vmatmul.bf16.gmra.mxu0 %v1302
    %v1322 = vpop.f32.mrf.mxu0
    %v1323 = vadd.f32 %v58, %v1322
    %v1324 = vpop.f32.mrf.mxu0
    %v1325 = vadd.f32 %v59, %v1324
    %1326 = vmatmul.bf16.gmra.mxu0 %v1305
    %v1327 = vpop.f32.mrf.mxu0
    %v1328 = vadd.f32 %v60, %v1327
    %v1329 = vpop.f32.mrf.mxu0
    %v1330 = vadd.f32 %v61, %v1329
    %1331 = vdwg.mxu0
    %v1332 = vsel %vm486, %v1323, -inf
    %1333 = vmax.xlane.f32.xlu0 %v1332
    %v1334 = vpop.xlane.xlu0 %1333
    %v1335 = vsel %vm486, %v1325, -inf
    %1336 = vmax.xlane.f32.xlu0 %v1335
    %v1337 = vpop.xlane.xlu0 %1336
    %v1338 = vsel %vm486, %v1328, -inf
    %1339 = vmax.xlane.f32.xlu0 %v1338
    %v1340 = vpop.xlane.xlu0 %1339
    %v1341 = vsel %vm486, %v1330, -inf
    %1342 = vmax.xlane.f32.xlu0 %v1341
    %v1343 = vpop.xlane.xlu0 %1342
    %v1344 = vsub.f32 %v1323, %v1334
    %v1345 = vsub.f32 %v1325, %v1337
    %v1346 = vsub.f32 %v1328, %v1340
    %v1347 = vsub.f32 %v1330, %v1343
    %v1348 = vmul.f32 %v1344, 1.442695
    %v1349 = vpow.pop %v1348
    %v1350 = vmul.f32 %v1345, 1.442695
    %v1351 = vpow.pop %v1350
    %v1352 = vmul.f32 %v1346, 1.442695
    %v1353 = vpow.pop %v1352
    %v1354 = vmul.f32 %v1347, 1.442695
    %v1355 = vpow.pop %v1354
    %v1356 = vsel %vm486, %v1349, 0.0
    %1357 = vadd.xlane.f32.xlu0 %v1356
    %v1358 = vpop.xlane.xlu0 %1357
    %v1359 = vsel %vm486, %v1351, 0.0
    %1360 = vadd.xlane.f32.xlu0 %v1359
    %v1361 = vpop.xlane.xlu0 %1360
    %v1362 = vsel %vm486, %v1353, 0.0
    %1363 = vadd.xlane.f32.xlu0 %v1362
    %v1364 = vpop.xlane.xlu0 %1363
    %v1365 = vsel %vm486, %v1355, 0.0
    %1366 = vadd.xlane.f32.xlu0 %v1365
    %v1367 = vpop.xlane.xlu0 %1366
    %v1368 = vrcp.pop %v1358
    %v1369 = vrcp.pop %v1361
    %v1370 = vrcp.pop %v1364
    %v1371 = vrcp.pop %v1367
    %v1372 = vmul.f32 %v1349, %v1368
    %v1373 = vmul.f32 %v1351, %v1369
    %v1374 = vmul.f32 %v1353, %v1370
    %v1375 = vmul.f32 %v1355, %v1371
    %v1376 = vpack.c.bf16 %v1373, %v1372
    %v1377 = vpack.c.bf16 %v1375, %v1374
    %1378 = vrot.lane.b32.xlu0 %v1252, 32
    %v1379 = vpop.permute.xlu0 %1378
    %1380 = vrot.lane.b32.xlu0 %v1253, 32
    %v1381 = vpop.permute.xlu0 %1380
    %v1385 = vsel %vm486, %v1376, 0
    %v1388 = vsel %vm486, %v1377, 0
    %1390 = vmatpush.bf16.msra.mxu0 0
    %1391 = vmatpush.bf16.msra.mxu0 0
    %1392 = vmatpush.bf16.msra.mxu0 0
    %1393 = vmatpush.bf16.msra.mxu0 0
    %1394 = vmatpush.bf16.msra.mxu0 0
    %1395 = vmatpush.bf16.msra.mxu0 0
    %1396 = vmatpush.bf16.msra.mxu0 %v1381
    %1397 = vmatpush.bf16.msra.mxu0 %v1379
    %1398 = vmatmul.bf16.gmra.mxu0 %v1385
    %v1399 = vpop.f32.mrf.mxu0
    %v1400 = vadd.f32 0.0, %v1399
    %v1401 = vpop.f32.mrf.mxu0
    %v1402 = vadd.f32 0.0, %v1401
    %1403 = vmatmul.bf16.gmra.mxu0 %v1388
    %v1404 = vpop.f32.mrf.mxu0
    %v1405 = vadd.f32 0.0, %v1404
    %v1406 = vpop.f32.mrf.mxu0
    %v1407 = vadd.f32 0.0, %v1406
    %1408 = vdwg.mxu0
    %v1409 = vpack.c.bf16 %v1402, %v1400
    %v1410 = vpack.c.bf16 %v1407, %v1405
    %v1415 = vunpack.c.l.b16 %v117
    %v1416 = vunpack.c.l.b16 %v118
    %v1417 = vunpack.c.l.b16 %v119
    %v1418 = vunpack.c.l.b16 %v120
    %v1419 = vpack.c.b16 %v1416, %v1415
    %v1420 = vpack.c.b16 %v1418, %v1417
    %v1424 = vsel %vm486, %v1409, 0
    %v1427 = vsel %vm486, %v1410, 0
    %1429 = vmatpush.bf16.msra.mxu0 0
    %1430 = vmatpush.bf16.msra.mxu0 0
    %1431 = vmatpush.bf16.msra.mxu0 0
    %1432 = vmatpush.bf16.msra.mxu0 0
    %1433 = vmatpush.bf16.msra.mxu0 0
    %1434 = vmatpush.bf16.msra.mxu0 0
    %1435 = vmatpush.bf16.msra.mxu0 %v1420
    %1436 = vmatpush.bf16.msra.mxu0 %v1419
    %1437 = vmatmul.bf16.gmra.mxu0 %v1424
    %v1438 = vpop.f32.mrf.mxu0
    %v1439 = vadd.f32 0.0, %v1438
    %v1440 = vpop.f32.mrf.mxu0
    %v1441 = vadd.f32 0.0, %v1440
    %1442 = vmatmul.bf16.gmra.mxu0 %v1427
    %v1443 = vpop.f32.mrf.mxu0
    %v1444 = vadd.f32 0.0, %v1443
    %v1445 = vpop.f32.mrf.mxu0
    %v1446 = vadd.f32 0.0, %v1445
    %1447 = vdwg.mxu0
    %v1452 = vunpack.c.l.b16 %v113
    %v1453 = vunpack.c.l.b16 %v114
    %v1454 = vunpack.c.l.b16 %v115
    %v1455 = vunpack.c.l.b16 %v116
    %v1456 = vpack.c.b16 %v1453, %v1452
    %v1457 = vpack.c.b16 %v1455, %v1454
    %v1461 = vsel %vm486, %v1287, 0
    %v1464 = vsel %vm486, %v1288, 0
    %1466 = vmatpush.bf16.msra.mxu0 0
    %1467 = vmatpush.bf16.msra.mxu0 0
    %1468 = vmatpush.bf16.msra.mxu0 0
    %1469 = vmatpush.bf16.msra.mxu0 0
    %1470 = vmatpush.bf16.msra.mxu0 0
    %1471 = vmatpush.bf16.msra.mxu0 0
    %1472 = vmatpush.bf16.msra.mxu0 %v1457
    %1473 = vmatpush.bf16.msra.mxu0 %v1456
    %1474 = vmatmul.bf16.gmra.mxu0 %v1461
    %v1475 = vpop.f32.mrf.mxu0
    %v1476 = vadd.f32 %v1439, %v1475
    %v1477 = vpop.f32.mrf.mxu0
    %v1478 = vadd.f32 %v1441, %v1477
    %1479 = vmatmul.bf16.gmra.mxu0 %v1464
    %v1480 = vpop.f32.mrf.mxu0
    %v1481 = vadd.f32 %v1444, %v1480
    %v1482 = vpop.f32.mrf.mxu0
    %v1483 = vadd.f32 %v1446, %v1482
    %1484 = vdwg.mxu0
    %v1485 = vperm.slane %v63, 1
    %v1486 = vadd.f32 %v1476, %v1485
    %v1487 = vadd.f32 %v1478, %v1485
    %v1488 = vadd.f32 %v1481, %v1485
    %v1489 = vadd.f32 %v1483, %v1485
    %v1490 = vadd.f32 %v794, %v1486
    %v1491 = vadd.f32 %v795, %v1487
    %v1492 = vadd.f32 %v796, %v1488
    %v1493 = vadd.f32 %v797, %v1489
    %v1494 = vsel %vm153, %v1490, 0.0
    %1495 = vadd.xlane.f32.xlu0 %v1494
    %v1496 = vpop.xlane.xlu0 %1495
    %v1497 = vsel %vm153, %v1491, 0.0
    %1498 = vadd.xlane.f32.xlu0 %v1497
    %v1499 = vpop.xlane.xlu0 %1498
    %v1500 = vsel %vm153, %v1492, 0.0
    %1501 = vadd.xlane.f32.xlu0 %v1500
    %v1502 = vpop.xlane.xlu0 %1501
    %v1503 = vsel %vm153, %v1493, 0.0
    %1504 = vadd.xlane.f32.xlu0 %v1503
    %v1505 = vpop.xlane.xlu0 %1504
    %v1506 = vmul.f32 %v1496, %v172
    %v1507 = vmul.f32 %v1499, %v172
    %v1508 = vmul.f32 %v1502, %v172
    %v1509 = vmul.f32 %v1505, %v172
    %v1510 = vsub.f32 %v1490, %v1506
    %v1511 = vsub.f32 %v1491, %v1507
    %v1512 = vsub.f32 %v1492, %v1508
    %v1513 = vsub.f32 %v1493, %v1509
    %v1514 = vmul.f32 %v1510, %v1510
    %v1515 = vmul.f32 %v1511, %v1511
    %v1516 = vmul.f32 %v1512, %v1512
    %v1517 = vmul.f32 %v1513, %v1513
    %v1518 = vsel %vm153, %v1514, 0.0
    %1519 = vadd.xlane.f32.xlu0 %v1518
    %v1520 = vpop.xlane.xlu0 %1519
    %v1521 = vsel %vm153, %v1515, 0.0
    %1522 = vadd.xlane.f32.xlu0 %v1521
    %v1523 = vpop.xlane.xlu0 %1522
    %v1524 = vsel %vm153, %v1516, 0.0
    %1525 = vadd.xlane.f32.xlu0 %v1524
    %v1526 = vpop.xlane.xlu0 %1525
    %v1527 = vsel %vm153, %v1517, 0.0
    %1528 = vadd.xlane.f32.xlu0 %v1527
    %v1529 = vpop.xlane.xlu0 %1528
    %v1530 = vmul.f32 %v1520, %v172
    %v1531 = vmul.f32 %v1523, %v172
    %v1532 = vmul.f32 %v1526, %v172
    %v1533 = vmul.f32 %v1529, %v172
    %v1534 = vadd.f32 %v1530, 1e-06
    %v1535 = vadd.f32 %v1531, 1e-06
    %v1536 = vadd.f32 %v1532, 1e-06
    %v1537 = vadd.f32 %v1533, 1e-06
    %v1538 = vrsqrt.pop %v1534
    %v1539 = vmul.f32 %v1538, %v1534
    %v1540 = vmul.f32 %v1539, %v1538
    %v1541 = vmul.f32 0.5, %v1540
    %v1542 = vsub.f32 1.5, %v1541
    %v1543 = vmul.f32 %v1538, %v1542
    %vm1544 = vweird.f32 %v1534
    %vm1545 = vweird.f32 %v1538
    %vm1546 = vmor %vm1544, %vm1545
    %v1547 = vsel %vm1546, %v1538, %v1543
    %v1548 = vrsqrt.pop %v1535
    %v1549 = vmul.f32 %v1548, %v1535
    %v1550 = vmul.f32 %v1549, %v1548
    %v1551 = vmul.f32 0.5, %v1550
    %v1552 = vsub.f32 1.5, %v1551
    %v1553 = vmul.f32 %v1548, %v1552
    %vm1554 = vweird.f32 %v1535
    %vm1555 = vweird.f32 %v1548
    %vm1556 = vmor %vm1554, %vm1555
    %v1557 = vsel %vm1556, %v1548, %v1553
    %v1558 = vrsqrt.pop %v1536
    %v1559 = vmul.f32 %v1558, %v1536
    %v1560 = vmul.f32 %v1559, %v1558
    %v1561 = vmul.f32 0.5, %v1560
    %v1562 = vsub.f32 1.5, %v1561
    %v1563 = vmul.f32 %v1558, %v1562
    %vm1564 = vweird.f32 %v1536
    %vm1565 = vweird.f32 %v1558
    %vm1566 = vmor %vm1564, %vm1565
    %v1567 = vsel %vm1566, %v1558, %v1563
    %v1568 = vrsqrt.pop %v1537
    %v1569 = vmul.f32 %v1568, %v1537
    %v1570 = vmul.f32 %v1569, %v1568
    %v1571 = vmul.f32 0.5, %v1570
    %v1572 = vsub.f32 1.5, %v1571
    %v1573 = vmul.f32 %v1568, %v1572
    %vm1574 = vweird.f32 %v1537
    %vm1575 = vweird.f32 %v1568
    %vm1576 = vmor %vm1574, %vm1575
    %v1577 = vsel %vm1576, %v1568, %v1573
    %v1578 = vmul.f32 %v1510, %v1547
    %v1579 = vmul.f32 %v1511, %v1557
    %v1580 = vmul.f32 %v1512, %v1567
    %v1581 = vmul.f32 %v1513, %v1577
    %v1582 = vperm.slane %v62, 6
    %v1583 = vmul.f32 %v1578, %v1582
    %v1584 = vmul.f32 %v1579, %v1582
    %v1585 = vmul.f32 %v1580, %v1582
    %v1586 = vmul.f32 %v1581, %v1582
    %v1587 = vperm.slane %v62, 7
    %v1588 = vadd.f32 %v1583, %v1587
    %v1589 = vadd.f32 %v1584, %v1587
    %v1590 = vadd.f32 %v1585, %v1587
    %v1591 = vadd.f32 %v1586, %v1587
    %v1592 = vpack.c.bf16 %v1589, %v1588
    %v1593 = vpack.c.bf16 %v1591, %v1590
    %v1595 = vperm.slane %v64, 0
    %v1596 = vperm.slane %v64, 1
    %v1607 = vunpack.c.l.b16 %v97
    %v1608 = vunpack.c.h.b16 %v97
    %v1609 = vunpack.c.l.b16 %v98
    %v1610 = vunpack.c.h.b16 %v98
    %v1611 = vunpack.c.l.b16 %v99
    %v1612 = vunpack.c.h.b16 %v99
    %v1613 = vunpack.c.l.b16 %v100
    %v1614 = vunpack.c.h.b16 %v100
    %v1615 = vunpack.c.l.b16 %v101
    %v1616 = vunpack.c.h.b16 %v101
    %v1617 = vunpack.c.l.b16 %v102
    %v1618 = vunpack.c.h.b16 %v102
    %v1619 = vunpack.c.l.b16 %v103
    %v1620 = vunpack.c.h.b16 %v103
    %v1621 = vunpack.c.l.b16 %v104
    %v1622 = vunpack.c.h.b16 %v104
    %v1623 = vpack.c.b16 %v1609, %v1607
    %v1624 = vpack.c.b16 %v1610, %v1608
    %v1625 = vpack.c.b16 %v1613, %v1611
    %v1626 = vpack.c.b16 %v1614, %v1612
    %v1627 = vpack.c.b16 %v1617, %v1615
    %v1628 = vpack.c.b16 %v1618, %v1616
    %v1629 = vpack.c.b16 %v1621, %v1619
    %v1630 = vpack.c.b16 %v1622, %v1620
    %v1640 = vsel %vm153, %v1592, 0
    %v1643 = vsel %vm153, %v1593, 0
    %1645 = vmatpush.bf16.msra.mxu0 0
    %1646 = vmatpush.bf16.msra.mxu0 0
    %1647 = vmatpush.bf16.msra.mxu0 0
    %1648 = vmatpush.bf16.msra.mxu0 0
    %1649 = vmatpush.bf16.msra.mxu0 %v1629
    %1650 = vmatpush.bf16.msra.mxu0 %v1627
    %1651 = vmatpush.bf16.msra.mxu0 %v1625
    %1652 = vmatpush.bf16.msra.mxu0 %v1623
    %1653 = vmatmul.bf16.gmra.mxu0 %v1640
    %v1654 = vpop.f32.mrf.mxu0
    %v1655 = vadd.f32 %v1595, %v1654
    %v1656 = vpop.f32.mrf.mxu0
    %v1657 = vadd.f32 %v1595, %v1656
    %1658 = vmatmul.bf16.gmra.mxu0 %v1643
    %v1659 = vpop.f32.mrf.mxu0
    %v1660 = vadd.f32 %v1595, %v1659
    %v1661 = vpop.f32.mrf.mxu0
    %v1662 = vadd.f32 %v1595, %v1661
    %1663 = vdwg.mxu0
    %1664 = vmatpush.bf16.msra.mxu0 0
    %1665 = vmatpush.bf16.msra.mxu0 0
    %1666 = vmatpush.bf16.msra.mxu0 0
    %1667 = vmatpush.bf16.msra.mxu0 0
    %1668 = vmatpush.bf16.msra.mxu0 %v1630
    %1669 = vmatpush.bf16.msra.mxu0 %v1628
    %1670 = vmatpush.bf16.msra.mxu0 %v1626
    %1671 = vmatpush.bf16.msra.mxu0 %v1624
    %1672 = vmatmul.bf16.gmra.mxu0 %v1640
    %v1673 = vpop.f32.mrf.mxu0
    %v1674 = vadd.f32 %v1596, %v1673
    %v1675 = vpop.f32.mrf.mxu0
    %v1676 = vadd.f32 %v1596, %v1675
    %1677 = vmatmul.bf16.gmra.mxu0 %v1643
    %v1678 = vpop.f32.mrf.mxu0
    %v1679 = vadd.f32 %v1596, %v1678
    %v1680 = vpop.f32.mrf.mxu0
    %v1681 = vadd.f32 %v1596, %v1680
    %1682 = vdwg.mxu0
    %v1683 = vmul.f32 %v1655, 0.5
    %v1684 = vmul.f32 %v1674, 0.5
    %v1685 = vmul.f32 %v1657, 0.5
    %v1686 = vmul.f32 %v1676, 0.5
    %v1687 = vmul.f32 %v1660, 0.5
    %v1688 = vmul.f32 %v1679, 0.5
    %v1689 = vmul.f32 %v1662, 0.5
    %v1690 = vmul.f32 %v1681, 0.5
    %v1691 = vmul.f32 %v1655, 0.70710677
    %v1692 = vmul.f32 %v1674, 0.70710677
    %v1693 = vmul.f32 %v1657, 0.70710677
    %v1694 = vmul.f32 %v1676, 0.70710677
    %v1695 = vmul.f32 %v1660, 0.70710677
    %v1696 = vmul.f32 %v1679, 0.70710677
    %v1697 = vmul.f32 %v1662, 0.70710677
    %v1698 = vmul.f32 %v1681, 0.70710677
    %v1699 = vand.u32 2147483647, %v1691
    %v1700 = vand.u32 2147483647, %v1692
    %v1701 = vand.u32 2147483647, %v1693
    %v1702 = vand.u32 2147483647, %v1694
    %v1703 = vand.u32 2147483647, %v1695
    %v1704 = vand.u32 2147483647, %v1696
    %v1705 = vand.u32 2147483647, %v1697
    %v1706 = vand.u32 2147483647, %v1698
    %v1707 = vmul.f32 %v1699, 0.5
    %v1708 = vmul.f32 %v1700, 0.5
    %v1709 = vmul.f32 %v1701, 0.5
    %v1710 = vmul.f32 %v1702, 0.5
    %v1711 = vmul.f32 %v1703, 0.5
    %v1712 = vmul.f32 %v1704, 0.5
    %v1713 = vmul.f32 %v1705, 0.5
    %v1714 = vmul.f32 %v1706, 0.5
    %v1715 = vadd.f32 %v1707, 1.0
    %v1716 = vadd.f32 %v1708, 1.0
    %v1717 = vadd.f32 %v1709, 1.0
    %v1718 = vadd.f32 %v1710, 1.0
    %v1719 = vadd.f32 %v1711, 1.0
    %v1720 = vadd.f32 %v1712, 1.0
    %v1721 = vadd.f32 %v1713, 1.0
    %v1722 = vadd.f32 %v1714, 1.0
    %v1723 = vrcp.pop %v1715
    %v1724 = vmul.f32 %v1715, %v1723
    %v1725 = vsub.f32 1.0, %v1724
    %v1726 = vmul.f32 %v1723, %v1725
    %v1727 = vadd.f32 %v1723, %v1726
    %vm1728 = vweird.f32 %v1715
    %vm1729 = vweird.f32 %v1723
    %vm1730 = vmor %vm1728, %vm1729
    %v1731 = vsel %vm1730, %v1723, %v1727
    %v1732 = vand.u32 2147483647, %v1715
    %vm1733 = vcmp.eq.f32.partialorder %v1732, 8.507059e+37
    %v1734 = vand.u32 %v1715, 2147483648
    %v1735 = vor.u32 1.1754944e-38, %v1734
    %v1736 = vsel %vm1733, %v1735, %v1731
    %v1737 = vmul.f32 1.0, %v1736
    %v1738 = vrcp.pop %v1716
    %v1739 = vmul.f32 %v1716, %v1738
    %v1740 = vsub.f32 1.0, %v1739
    %v1741 = vmul.f32 %v1738, %v1740
    %v1742 = vadd.f32 %v1738, %v1741
    %vm1743 = vweird.f32 %v1716
    %vm1744 = vweird.f32 %v1738
    %vm1745 = vmor %vm1743, %vm1744
    %v1746 = vsel %vm1745, %v1738, %v1742
    %v1747 = vand.u32 2147483647, %v1716
    %vm1748 = vcmp.eq.f32.partialorder %v1747, 8.507059e+37
    %v1749 = vand.u32 %v1716, 2147483648
    %v1750 = vor.u32 1.1754944e-38, %v1749
    %v1751 = vsel %vm1748, %v1750, %v1746
    %v1752 = vmul.f32 1.0, %v1751
    %v1753 = vrcp.pop %v1717
    %v1754 = vmul.f32 %v1717, %v1753
    %v1755 = vsub.f32 1.0, %v1754
    %v1756 = vmul.f32 %v1753, %v1755
    %v1757 = vadd.f32 %v1753, %v1756
    %vm1758 = vweird.f32 %v1717
    %vm1759 = vweird.f32 %v1753
    %vm1760 = vmor %vm1758, %vm1759
    %v1761 = vsel %vm1760, %v1753, %v1757
    %v1762 = vand.u32 2147483647, %v1717
    %vm1763 = vcmp.eq.f32.partialorder %v1762, 8.507059e+37
    %v1764 = vand.u32 %v1717, 2147483648
    %v1765 = vor.u32 1.1754944e-38, %v1764
    %v1766 = vsel %vm1763, %v1765, %v1761
    %v1767 = vmul.f32 1.0, %v1766
    %v1768 = vrcp.pop %v1718
    %v1769 = vmul.f32 %v1718, %v1768
    %v1770 = vsub.f32 1.0, %v1769
    %v1771 = vmul.f32 %v1768, %v1770
    %v1772 = vadd.f32 %v1768, %v1771
    %vm1773 = vweird.f32 %v1718
    %vm1774 = vweird.f32 %v1768
    %vm1775 = vmor %vm1773, %vm1774
    %v1776 = vsel %vm1775, %v1768, %v1772
    %v1777 = vand.u32 2147483647, %v1718
    %vm1778 = vcmp.eq.f32.partialorder %v1777, 8.507059e+37
    %v1779 = vand.u32 %v1718, 2147483648
    %v1780 = vor.u32 1.1754944e-38, %v1779
    %v1781 = vsel %vm1778, %v1780, %v1776
    %v1782 = vmul.f32 1.0, %v1781
    %v1783 = vrcp.pop %v1719
    %v1784 = vmul.f32 %v1719, %v1783
    %v1785 = vsub.f32 1.0, %v1784
    %v1786 = vmul.f32 %v1783, %v1785
    %v1787 = vadd.f32 %v1783, %v1786
    %vm1788 = vweird.f32 %v1719
    %vm1789 = vweird.f32 %v1783
    %vm1790 = vmor %vm1788, %vm1789
    %v1791 = vsel %vm1790, %v1783, %v1787
    %v1792 = vand.u32 2147483647, %v1719
    %vm1793 = vcmp.eq.f32.partialorder %v1792, 8.507059e+37
    %v1794 = vand.u32 %v1719, 2147483648
    %v1795 = vor.u32 1.1754944e-38, %v1794
    %v1796 = vsel %vm1793, %v1795, %v1791
    %v1797 = vmul.f32 1.0, %v1796
    %v1798 = vrcp.pop %v1720
    %v1799 = vmul.f32 %v1720, %v1798
    %v1800 = vsub.f32 1.0, %v1799
    %v1801 = vmul.f32 %v1798, %v1800
    %v1802 = vadd.f32 %v1798, %v1801
    %vm1803 = vweird.f32 %v1720
    %vm1804 = vweird.f32 %v1798
    %vm1805 = vmor %vm1803, %vm1804
    %v1806 = vsel %vm1805, %v1798, %v1802
    %v1807 = vand.u32 2147483647, %v1720
    %vm1808 = vcmp.eq.f32.partialorder %v1807, 8.507059e+37
    %v1809 = vand.u32 %v1720, 2147483648
    %v1810 = vor.u32 1.1754944e-38, %v1809
    %v1811 = vsel %vm1808, %v1810, %v1806
    %v1812 = vmul.f32 1.0, %v1811
    %v1813 = vrcp.pop %v1721
    %v1814 = vmul.f32 %v1721, %v1813
    %v1815 = vsub.f32 1.0, %v1814
    %v1816 = vmul.f32 %v1813, %v1815
    %v1817 = vadd.f32 %v1813, %v1816
    %vm1818 = vweird.f32 %v1721
    %vm1819 = vweird.f32 %v1813
    %vm1820 = vmor %vm1818, %vm1819
    %v1821 = vsel %vm1820, %v1813, %v1817
    %v1822 = vand.u32 2147483647, %v1721
    %vm1823 = vcmp.eq.f32.partialorder %v1822, 8.507059e+37
    %v1824 = vand.u32 %v1721, 2147483648
    %v1825 = vor.u32 1.1754944e-38, %v1824
    %v1826 = vsel %vm1823, %v1825, %v1821
    %v1827 = vmul.f32 1.0, %v1826
    %v1828 = vrcp.pop %v1722
    %v1829 = vmul.f32 %v1722, %v1828
    %v1830 = vsub.f32 1.0, %v1829
    %v1831 = vmul.f32 %v1828, %v1830
    %v1832 = vadd.f32 %v1828, %v1831
    %vm1833 = vweird.f32 %v1722
    %vm1834 = vweird.f32 %v1828
    %vm1835 = vmor %vm1833, %vm1834
    %v1836 = vsel %vm1835, %v1828, %v1832
    %v1837 = vand.u32 2147483647, %v1722
    %vm1838 = vcmp.eq.f32.partialorder %v1837, 8.507059e+37
    %v1839 = vand.u32 %v1722, 2147483648
    %v1840 = vor.u32 1.1754944e-38, %v1839
    %v1841 = vsel %vm1838, %v1840, %v1836
    %v1842 = vmul.f32 1.0, %v1841
    %v1843 = vmul.f32 %v1737, 0.17087276
    %v1844 = vmul.f32 %v1752, 0.17087276
    %v1845 = vmul.f32 %v1767, 0.17087276
    %v1846 = vmul.f32 %v1782, 0.17087276
    %v1847 = vmul.f32 %v1797, 0.17087276
    %v1848 = vmul.f32 %v1812, 0.17087276
    %v1849 = vmul.f32 %v1827, 0.17087276
    %v1850 = vmul.f32 %v1842, 0.17087276
    %v1851 = vadd.f32 %v1843, -0.82215226
    %v1852 = vadd.f32 %v1844, -0.82215226
    %v1853 = vadd.f32 %v1845, -0.82215226
    %v1854 = vadd.f32 %v1846, -0.82215226
    %v1855 = vadd.f32 %v1847, -0.82215226
    %v1856 = vadd.f32 %v1848, -0.82215226
    %v1857 = vadd.f32 %v1849, -0.82215226
    %v1858 = vadd.f32 %v1850, -0.82215226
    %v1859 = vmul.f32 %v1737, %v1851
    %v1860 = vmul.f32 %v1752, %v1852
    %v1861 = vmul.f32 %v1767, %v1853
    %v1862 = vmul.f32 %v1782, %v1854
    %v1863 = vmul.f32 %v1797, %v1855
    %v1864 = vmul.f32 %v1812, %v1856
    %v1865 = vmul.f32 %v1827, %v1857
    %v1866 = vmul.f32 %v1842, %v1858
    %v1867 = vadd.f32 %v1859, 1.4885159
    %v1868 = vadd.f32 %v1860, 1.4885159
    %v1869 = vadd.f32 %v1861, 1.4885159
    %v1870 = vadd.f32 %v1862, 1.4885159
    %v1871 = vadd.f32 %v1863, 1.4885159
    %v1872 = vadd.f32 %v1864, 1.4885159
    %v1873 = vadd.f32 %v1865, 1.4885159
    %v1874 = vadd.f32 %v1866, 1.4885159
    %v1875 = vmul.f32 %v1737, %v1867
    %v1876 = vmul.f32 %v1752, %v1868
    %v1877 = vmul.f32 %v1767, %v1869
    %v1878 = vmul.f32 %v1782, %v1870
    %v1879 = vmul.f32 %v1797, %v1871
    %v1880 = vmul.f32 %v1812, %v1872
    %v1881 = vmul.f32 %v1827, %v1873
    %v1882 = vmul.f32 %v1842, %v1874
    %v1883 = vadd.f32 %v1875, -1.135204
    %v1884 = vadd.f32 %v1876, -1.135204
    %v1885 = vadd.f32 %v1877, -1.135204
    %v1886 = vadd.f32 %v1878, -1.135204
    %v1887 = vadd.f32 %v1879, -1.135204
    %v1888 = vadd.f32 %v1880, -1.135204
    %v1889 = vadd.f32 %v1881, -1.135204
    %v1890 = vadd.f32 %v1882, -1.135204
    %v1891 = vmul.f32 %v1737, %v1883
    %v1892 = vmul.f32 %v1752, %v1884
    %v1893 = vmul.f32 %v1767, %v1885
    %v1894 = vmul.f32 %v1782, %v1886
    %v1895 = vmul.f32 %v1797, %v1887
    %v1896 = vmul.f32 %v1812, %v1888
    %v1897 = vmul.f32 %v1827, %v1889
    %v1898 = vmul.f32 %v1842, %v1890
    %v1899 = vadd.f32 %v1891, 0.27886808
    %v1900 = vadd.f32 %v1892, 0.27886808
    %v1901 = vadd.f32 %v1893, 0.27886808
    %v1902 = vadd.f32 %v1894, 0.27886808
    %v1903 = vadd.f32 %v1895, 0.27886808
    %v1904 = vadd.f32 %v1896, 0.27886808
    %v1905 = vadd.f32 %v1897, 0.27886808
    %v1906 = vadd.f32 %v1898, 0.27886808
    %v1907 = vmul.f32 %v1737, %v1899
    %v1908 = vmul.f32 %v1752, %v1900
    %v1909 = vmul.f32 %v1767, %v1901
    %v1910 = vmul.f32 %v1782, %v1902
    %v1911 = vmul.f32 %v1797, %v1903
    %v1912 = vmul.f32 %v1812, %v1904
    %v1913 = vmul.f32 %v1827, %v1905
    %v1914 = vmul.f32 %v1842, %v1906
    %v1915 = vadd.f32 %v1907, -0.18628806
    %v1916 = vadd.f32 %v1908, -0.18628806
    %v1917 = vadd.f32 %v1909, -0.18628806
    %v1918 = vadd.f32 %v1910, -0.18628806
    %v1919 = vadd.f32 %v1911, -0.18628806
    %v1920 = vadd.f32 %v1912, -0.18628806
    %v1921 = vadd.f32 %v1913, -0.18628806
    %v1922 = vadd.f32 %v1914, -0.18628806
    %v1923 = vmul.f32 %v1737, %v1915
    %v1924 = vmul.f32 %v1752, %v1916
    %v1925 = vmul.f32 %v1767, %v1917
    %v1926 = vmul.f32 %v1782, %v1918
    %v1927 = vmul.f32 %v1797, %v1919
    %v1928 = vmul.f32 %v1812, %v1920
    %v1929 = vmul.f32 %v1827, %v1921
    %v1930 = vmul.f32 %v1842, %v1922
    %v1931 = vadd.f32 %v1923, 0.09678418
    %v1932 = vadd.f32 %v1924, 0.09678418
    %v1933 = vadd.f32 %v1925, 0.09678418
    %v1934 = vadd.f32 %v1926, 0.09678418
    %v1935 = vadd.f32 %v1927, 0.09678418
    %v1936 = vadd.f32 %v1928, 0.09678418
    %v1937 = vadd.f32 %v1929, 0.09678418
    %v1938 = vadd.f32 %v1930, 0.09678418
    %v1939 = vmul.f32 %v1737, %v1931
    %v1940 = vmul.f32 %v1752, %v1932
    %v1941 = vmul.f32 %v1767, %v1933
    %v1942 = vmul.f32 %v1782, %v1934
    %v1943 = vmul.f32 %v1797, %v1935
    %v1944 = vmul.f32 %v1812, %v1936
    %v1945 = vmul.f32 %v1827, %v1937
    %v1946 = vmul.f32 %v1842, %v1938
    %v1947 = vadd.f32 %v1939, 0.37409195
    %v1948 = vadd.f32 %v1940, 0.37409195
    %v1949 = vadd.f32 %v1941, 0.37409195
    %v1950 = vadd.f32 %v1942, 0.37409195
    %v1951 = vadd.f32 %v1943, 0.37409195
    %v1952 = vadd.f32 %v1944, 0.37409195
    %v1953 = vadd.f32 %v1945, 0.37409195
    %v1954 = vadd.f32 %v1946, 0.37409195
    %v1955 = vmul.f32 %v1737, %v1947
    %v1956 = vmul.f32 %v1752, %v1948
    %v1957 = vmul.f32 %v1767, %v1949
    %v1958 = vmul.f32 %v1782, %v1950
    %v1959 = vmul.f32 %v1797, %v1951
    %v1960 = vmul.f32 %v1812, %v1952
    %v1961 = vmul.f32 %v1827, %v1953
    %v1962 = vmul.f32 %v1842, %v1954
    %v1963 = vadd.f32 %v1955, 1.0000237
    %v1964 = vadd.f32 %v1956, 1.0000237
    %v1965 = vadd.f32 %v1957, 1.0000237
    %v1966 = vadd.f32 %v1958, 1.0000237
    %v1967 = vadd.f32 %v1959, 1.0000237
    %v1968 = vadd.f32 %v1960, 1.0000237
    %v1969 = vadd.f32 %v1961, 1.0000237
    %v1970 = vadd.f32 %v1962, 1.0000237
    %v1971 = vmul.f32 %v1737, %v1963
    %v1972 = vmul.f32 %v1752, %v1964
    %v1973 = vmul.f32 %v1767, %v1965
    %v1974 = vmul.f32 %v1782, %v1966
    %v1975 = vmul.f32 %v1797, %v1967
    %v1976 = vmul.f32 %v1812, %v1968
    %v1977 = vmul.f32 %v1827, %v1969
    %v1978 = vmul.f32 %v1842, %v1970
    %v1979 = vadd.f32 %v1971, -1.2655122
    %v1980 = vadd.f32 %v1972, -1.2655122
    %v1981 = vadd.f32 %v1973, -1.2655122
    %v1982 = vadd.f32 %v1974, -1.2655122
    %v1983 = vadd.f32 %v1975, -1.2655122
    %v1984 = vadd.f32 %v1976, -1.2655122
    %v1985 = vadd.f32 %v1977, -1.2655122
    %v1986 = vadd.f32 %v1978, -1.2655122
    %v1987 = vsub.f32 0.0, %v1699
    %v1988 = vsub.f32 0.0, %v1700
    %v1989 = vsub.f32 0.0, %v1701
    %v1990 = vsub.f32 0.0, %v1702
    %v1991 = vsub.f32 0.0, %v1703
    %v1992 = vsub.f32 0.0, %v1704
    %v1993 = vsub.f32 0.0, %v1705
    %v1994 = vsub.f32 0.0, %v1706
    %v1995 = vmul.f32 %v1987, %v1699
    %v1996 = vmul.f32 %v1988, %v1700
    %v1997 = vmul.f32 %v1989, %v1701
    %v1998 = vmul.f32 %v1990, %v1702
    %v1999 = vmul.f32 %v1991, %v1703
    %v2000 = vmul.f32 %v1992, %v1704
    %v2001 = vmul.f32 %v1993, %v1705
    %v2002 = vmul.f32 %v1994, %v1706
    %v2003 = vadd.f32 %v1995, %v1979
    %v2004 = vadd.f32 %v1996, %v1980
    %v2005 = vadd.f32 %v1997, %v1981
    %v2006 = vadd.f32 %v1998, %v1982
    %v2007 = vadd.f32 %v1999, %v1983
    %v2008 = vadd.f32 %v2000, %v1984
    %v2009 = vadd.f32 %v2001, %v1985
    %v2010 = vadd.f32 %v2002, %v1986
    %v2011 = vmul.f32 %v2003, 1.442695
    %v2012 = vpow.pop %v2011
    %v2013 = vmul.f32 %v2004, 1.442695
    %v2014 = vpow.pop %v2013
    %v2015 = vmul.f32 %v2005, 1.442695
    %v2016 = vpow.pop %v2015
    %v2017 = vmul.f32 %v2006, 1.442695
    %v2018 = vpow.pop %v2017
    %v2019 = vmul.f32 %v2007, 1.442695
    %v2020 = vpow.pop %v2019
    %v2021 = vmul.f32 %v2008, 1.442695
    %v2022 = vpow.pop %v2021
    %v2023 = vmul.f32 %v2009, 1.442695
    %v2024 = vpow.pop %v2023
    %v2025 = vmul.f32 %v2010, 1.442695
    %v2026 = vpow.pop %v2025
    %v2027 = vmul.f32 %v1737, %v2012
    %v2028 = vmul.f32 %v1752, %v2014
    %v2029 = vmul.f32 %v1767, %v2016
    %v2030 = vmul.f32 %v1782, %v2018
    %v2031 = vmul.f32 %v1797, %v2020
    %v2032 = vmul.f32 %v1812, %v2022
    %v2033 = vmul.f32 %v1827, %v2024
    %v2034 = vmul.f32 %v1842, %v2026
    %vm2035 = vcmp.ge.f32.partialorder %v1691, 0.0
    %vm2036 = vcmp.ge.f32.partialorder %v1692, 0.0
    %vm2037 = vcmp.ge.f32.partialorder %v1693, 0.0
    %vm2038 = vcmp.ge.f32.partialorder %v1694, 0.0
    %vm2039 = vcmp.ge.f32.partialorder %v1695, 0.0
    %vm2040 = vcmp.ge.f32.partialorder %v1696, 0.0
    %vm2041 = vcmp.ge.f32.partialorder %v1697, 0.0
    %vm2042 = vcmp.ge.f32.partialorder %v1698, 0.0
    %v2043 = vsub.f32 1.0, %v2027
    %v2044 = vsub.f32 1.0, %v2028
    %v2045 = vsub.f32 1.0, %v2029
    %v2046 = vsub.f32 1.0, %v2030
    %v2047 = vsub.f32 1.0, %v2031
    %v2048 = vsub.f32 1.0, %v2032
    %v2049 = vsub.f32 1.0, %v2033
    %v2050 = vsub.f32 1.0, %v2034
    %v2051 = vsub.f32 %v2027, 1.0
    %v2052 = vsub.f32 %v2028, 1.0
    %v2053 = vsub.f32 %v2029, 1.0
    %v2054 = vsub.f32 %v2030, 1.0
    %v2055 = vsub.f32 %v2031, 1.0
    %v2056 = vsub.f32 %v2032, 1.0
    %v2057 = vsub.f32 %v2033, 1.0
    %v2058 = vsub.f32 %v2034, 1.0
    %v2059 = vsel %vm2035, %v2043, %v2051
    %v2060 = vsel %vm2036, %v2044, %v2052
    %v2061 = vsel %vm2037, %v2045, %v2053
    %v2062 = vsel %vm2038, %v2046, %v2054
    %v2063 = vsel %vm2039, %v2047, %v2055
    %v2064 = vsel %vm2040, %v2048, %v2056
    %v2065 = vsel %vm2041, %v2049, %v2057
    %v2066 = vsel %vm2042, %v2050, %v2058
    %v2067 = vadd.f32 %v2059, 1.0
    %v2068 = vadd.f32 %v2060, 1.0
    %v2069 = vadd.f32 %v2061, 1.0
    %v2070 = vadd.f32 %v2062, 1.0
    %v2071 = vadd.f32 %v2063, 1.0
    %v2072 = vadd.f32 %v2064, 1.0
    %v2073 = vadd.f32 %v2065, 1.0
    %v2074 = vadd.f32 %v2066, 1.0
    %v2075 = vmul.f32 %v1683, %v2067
    %v2076 = vmul.f32 %v1684, %v2068
    %v2077 = vmul.f32 %v1685, %v2069
    %v2078 = vmul.f32 %v1686, %v2070
    %v2079 = vmul.f32 %v1687, %v2071
    %v2080 = vmul.f32 %v1688, %v2072
    %v2081 = vmul.f32 %v1689, %v2073
    %v2082 = vmul.f32 %v1690, %v2074
    %v2083 = vpack.c.bf16 %v2077, %v2075
    %v2084 = vpack.c.bf16 %v2078, %v2076
    %v2085 = vpack.c.bf16 %v2081, %v2079
    %v2086 = vpack.c.bf16 %v2082, %v2080
    %v2119 = vunpack.c.l.b16 %v121
    %v2120 = vunpack.c.l.b16 %v122
    %v2121 = vunpack.c.l.b16 %v123
    %v2122 = vunpack.c.l.b16 %v124
    %v2123 = vunpack.c.l.b16 %v125
    %v2124 = vunpack.c.l.b16 %v126
    %v2125 = vunpack.c.l.b16 %v127
    %v2126 = vunpack.c.l.b16 %v128
    %v2127 = vunpack.c.l.b16 %v129
    %v2128 = vunpack.c.l.b16 %v130
    %v2129 = vunpack.c.l.b16 %v131
    %v2130 = vunpack.c.l.b16 %v132
    %v2131 = vunpack.c.l.b16 %v133
    %v2132 = vunpack.c.l.b16 %v134
    %v2133 = vunpack.c.l.b16 %v135
    %v2134 = vunpack.c.l.b16 %v136
    %v2135 = vunpack.c.l.b16 %v137
    %v2136 = vunpack.c.l.b16 %v138
    %v2137 = vunpack.c.l.b16 %v139
    %v2138 = vunpack.c.l.b16 %v140
    %v2139 = vunpack.c.l.b16 %v141
    %v2140 = vunpack.c.l.b16 %v142
    %v2141 = vunpack.c.l.b16 %v143
    %v2142 = vunpack.c.l.b16 %v144
    %v2143 = vunpack.c.l.b16 %v145
    %v2144 = vunpack.c.l.b16 %v146
    %v2145 = vunpack.c.l.b16 %v147
    %v2146 = vunpack.c.l.b16 %v148
    %v2147 = vunpack.c.l.b16 %v149
    %v2148 = vunpack.c.l.b16 %v150
    %v2149 = vunpack.c.l.b16 %v151
    %v2150 = vunpack.c.l.b16 %v152
    %v2151 = vpack.c.b16 %v2120, %v2119
    %v2152 = vpack.c.b16 %v2122, %v2121
    %v2153 = vpack.c.b16 %v2124, %v2123
    %v2154 = vpack.c.b16 %v2126, %v2125
    %v2155 = vpack.c.b16 %v2128, %v2127
    %v2156 = vpack.c.b16 %v2130, %v2129
    %v2157 = vpack.c.b16 %v2132, %v2131
    %v2158 = vpack.c.b16 %v2134, %v2133
    %v2159 = vpack.c.b16 %v2136, %v2135
    %v2160 = vpack.c.b16 %v2138, %v2137
    %v2161 = vpack.c.b16 %v2140, %v2139
    %v2162 = vpack.c.b16 %v2142, %v2141
    %v2163 = vpack.c.b16 %v2144, %v2143
    %v2164 = vpack.c.b16 %v2146, %v2145
    %v2165 = vpack.c.b16 %v2148, %v2147
    %v2166 = vpack.c.b16 %v2150, %v2149
    %2183 = vmatpush.bf16.msra.mxu0 %v2158
    %2184 = vmatpush.bf16.msra.mxu0 %v2157
    %2185 = vmatpush.bf16.msra.mxu0 %v2156
    %2186 = vmatpush.bf16.msra.mxu0 %v2155
    %2187 = vmatpush.bf16.msra.mxu0 %v2154
    %2188 = vmatpush.bf16.msra.mxu0 %v2153
    %2189 = vmatpush.bf16.msra.mxu0 %v2152
    %2190 = vmatpush.bf16.msra.mxu0 %v2151
    %2191 = vmatmul.bf16.gmra.mxu0 %v2083
    %v2192 = vpop.f32.mrf.mxu0
    %v2193 = vadd.f32 0.0, %v2192
    %v2194 = vpop.f32.mrf.mxu0
    %v2195 = vadd.f32 0.0, %v2194
    %2196 = vmatmul.bf16.gmra.mxu0 %v2085
    %v2197 = vpop.f32.mrf.mxu0
    %v2198 = vadd.f32 0.0, %v2197
    %v2199 = vpop.f32.mrf.mxu0
    %v2200 = vadd.f32 0.0, %v2199
    %2201 = vdwg.mxu0
    %2202 = vmatpush.bf16.msra.mxu0 %v2166
    %2203 = vmatpush.bf16.msra.mxu0 %v2165
    %2204 = vmatpush.bf16.msra.mxu0 %v2164
    %2205 = vmatpush.bf16.msra.mxu0 %v2163
    %2206 = vmatpush.bf16.msra.mxu0 %v2162
    %2207 = vmatpush.bf16.msra.mxu0 %v2161
    %2208 = vmatpush.bf16.msra.mxu0 %v2160
    %2209 = vmatpush.bf16.msra.mxu0 %v2159
    %2210 = vmatmul.bf16.gmra.mxu0 %v2084
    %v2211 = vpop.f32.mrf.mxu0
    %v2212 = vadd.f32 %v2193, %v2211
    %v2213 = vpop.f32.mrf.mxu0
    %v2214 = vadd.f32 %v2195, %v2213
    %2215 = vmatmul.bf16.gmra.mxu0 %v2086
    %v2216 = vpop.f32.mrf.mxu0
    %v2217 = vadd.f32 %v2198, %v2216
    %v2218 = vpop.f32.mrf.mxu0
    %v2219 = vadd.f32 %v2200, %v2218
    %2220 = vdwg.mxu0
    %v2221 = vadd.f32 %v1490, %v2212
    %v2222 = vadd.f32 %v1491, %v2214
    %v2223 = vadd.f32 %v1492, %v2217
    %v2224 = vadd.f32 %v1493, %v2219
    %v2225 = vperm.slane %v63, 2
    %v2226 = vadd.f32 %v2221, %v2225
    %v2227 = vadd.f32 %v2222, %v2225
    %v2228 = vadd.f32 %v2223, %v2225
    %v2229 = vadd.f32 %v2224, %v2225
    %2230 = vst.msk [vmem:[#allocation2] sm:$0xff] %vm153, %v2226
    %2231 = vst.msk [vmem:[#allocation2 + $0x8] sm:$0xff] %vm153, %v2227
    %2232 = vst.msk [vmem:[#allocation2 + $0x10] sm:$0xff] %vm153, %v2228
    %2233 = vst.msk [vmem:[#allocation2 + $0x18] sm:$0xff] %vm153, %v2229
    // Predicated region
    $region38: #{tpu_custom_call.1} parent=1 // pred_check
      _
    $region39: #{tpu_custom_call.1} parent=1 // pred_check_branch
      %2235 = sbr.rel (0) target = $region41
    $region40: #{tpu_custom_call.1} parent=1 // pred_region
      %2237 = vsyncadd [#allocation3], 0
      %s2238 = sshll.u32 [#allocation2], 4
      %s2239 = int_to_ptr.vmem [resolvable:$true] %s2238
      %s2240 = sshll.u32 %s9, 4
      %s2241 = int_to_ptr.hbm [resolvable:$true] %s2240
      %2246 = dma.vmem_to_hbm [thread:$0]  %s2239, 512, %s2241, [#allocation3], 128, 128, 8
    $region41: #{tpu_custom_call.1} parent=1 // pred_fallthru
      _
    // Predicated region
    $region42: #{tpu_custom_call.1} parent=1 // pred_check
      _
    $region43: #{tpu_custom_call.1} parent=1 // pred_check_branch
      %2248 = sbr.rel (0) target = $region45
    $region44: #{tpu_custom_call.1} parent=1 // pred_region
      %2250 = dma.done [#allocation3], 512
    $region45: #{tpu_custom_call.1} parent=1 // pred_fallthru
      _
    %2251 = vsyncpa [#allocation3], 1

</llo_original>
